<compile_context>
chip_gen: v7x
topology: tpu7x:2x2x1
jax: 0.10.0
libtpu: 0.0.40
codegen_flags: <defaults>
</compile_context>

<pallas_src>
import functools

import jax
import jax.numpy as jnp
import numpy as np
from jax import lax
from jax.experimental import pallas as pl
from jax.experimental.pallas import tpu as pltpu

LANE = 128


def _round_up(v, m):
    return (v + m - 1) // m * m


# --------------------------------- kernel -----------------------------------

def adapter_classifier_kernel(x_ref, w1_ref, wstack_ref, vec_ref, out_ref, *,
                              P, out_dim, eps):
    """One row tile: fc1->relu->fc2->relu->fc3->relu->layernorm->head."""
    f32 = jnp.float32
    bf16 = jnp.bfloat16

    x = x_ref[...].astype(bf16)          # (tm, in_dim), K left un-padded

    b1 = vec_ref[0:1, :]                 # all (1, P), f32, zero-padded
    b2 = vec_ref[1:2, :]
    b3 = vec_ref[2:3, :]
    gamma = vec_ref[3:4, :]
    beta = vec_ref[4:5, :]
    bh = vec_ref[5:6, :]

    # Adapter: three Linear+ReLU layers. bf16 MXU operands, f32 accumulate.
    h = jnp.maximum(jnp.dot(x, w1_ref[...], preferred_element_type=f32) + b1, 0.0)
    h = jnp.maximum(jnp.dot(h.astype(bf16), wstack_ref[0],
                            preferred_element_type=f32) + b2, 0.0)
    h = jnp.maximum(jnp.dot(h.astype(bf16), wstack_ref[1],
                            preferred_element_type=f32) + b3, 0.0)

    # LayerNorm over the REAL out_dim columns. Padded columns of h are exactly
    # zero (zero-padded W3/b3 + ReLU), so sum(h) over the padded width equals
    # the real-column sum. Variance uses the two-pass (h-mean)^2 form with an
    # explicit column mask for numerical safety.
    inv_n = 1.0 / out_dim
    mean = jnp.sum(h, axis=-1, keepdims=True) * inv_n
    diff = h - mean
    col = lax.broadcasted_iota(jnp.int32, h.shape, 1)
    diff_real = jnp.where(col < out_dim, diff, 0.0)
    var = jnp.sum(diff_real * diff_real, axis=-1, keepdims=True) * inv_n
    inv_std = lax.rsqrt(var + eps)
    # gamma/beta are zero in the padded columns -> padded feature cols are 0.
    feat = diff * inv_std * gamma + beta

    # Classification head.
    logits = jnp.dot(feat.astype(bf16), wstack_ref[2],
                     preferred_element_type=f32) + bh

    # Single fused, lane-dense output block: [features | logits].
    out_ref[:, :P] = feat.astype(out_ref.dtype)
    out_ref[:, P:] = logits.astype(out_ref.dtype)


# ------------------------------ param packing -------------------------------

def pad_params(params):
    """Pack/pad parameters once, outside the kernel.

    * Hidden/output/class dims are zero-padded to a common P (multiple of 128)
      so W2/W3/W_head stack into one (3, P, P) bf16 operand.
    * x's feature dim (matmul K of fc1) is NOT padded.
    * The six bias/affine vectors are packed into one (6, P) f32 array.
    """
    w1, b1, w2, b2, w3, b3, gamma, beta, wh, bh = params
    in_dim, h1 = w1.shape
    h2 = w2.shape[1]
    out_dim = w3.shape[1]
    nc = wh.shape[1]
    P = _round_up(max(h1, h2, out_dim, nc), LANE)

    def pad2(w, r, c):
        return jnp.pad(w, ((0, r - w.shape[0]), (0, c - w.shape[1])))

    def padv(v):
        v = v.reshape(1, -1)
        return jnp.pad(v, ((0, 0), (0, P - v.shape[1])))

    w1p = pad2(w1, in_dim, P).astype(jnp.bfloat16)                 # (in_dim, P)
    wstack = jnp.stack([pad2(w2, P, P), pad2(w3, P, P),
                        pad2(wh, P, P)]).astype(jnp.bfloat16)      # (3, P, P)
    vec = jnp.concatenate([padv(b1), padv(b2), padv(b3),
                           padv(gamma), padv(beta), padv(bh)],
                          axis=0).astype(jnp.float32)              # (6, P)
    return (w1p, wstack, vec), out_dim, nc


# --------------------------------- wrapper ----------------------------------

@functools.partial(jax.jit, static_argnames=("out_dim", "num_classes", "tm_max"))
def adapter_classifier(x, padded_params, *, out_dim, num_classes, tm_max=1024):
    w1, wstack, vec = padded_params
    n, in_dim = x.shape
    P = wstack.shape[-1]

    # Row tile: as large as possible (amortize ~0.35us/step) while keeping
    # >= 2 grid steps when the batch allows, so both v7x TensorCores get work.
    tm = max(8, min(tm_max, _round_up(-(-n // 2), 8)))
    n_pad = _round_up(n, tm)
    xp = x if n_pad == n else jnp.pad(x, ((0, n_pad - n), (0, 0)))

    grid = (n_pad // tm,)
    full2 = lambda i: (0, 0)
    full3 = lambda i: (0, 0, 0)

    kernel = functools.partial(adapter_classifier_kernel,
                               P=P, out_dim=out_dim, eps=1e-5)

    fused = pl.pallas_call(
        kernel,
        out_shape=jax.ShapeDtypeStruct((n_pad, 2 * P), jnp.float32),
        grid_spec=pltpu.PrefetchScalarGridSpec(
            num_scalar_prefetch=0,
            grid=grid,
            in_specs=[
                pl.BlockSpec((tm, in_dim), lambda i: (i, 0)),  # x row tile (K un-padded)
                pl.BlockSpec(w1.shape, full2),                 # W1 (in_dim, P) bf16, resident
                pl.BlockSpec(wstack.shape, full3),             # [W2|W3|Wh] (3, P, P) bf16, resident
                pl.BlockSpec(vec.shape, full2),                # b1,b2,b3,gamma,beta,bh (6, P) f32
            ],
            out_specs=pl.BlockSpec((tm, 2 * P), lambda i: (i, 0)),
        ),
        compiler_params=pltpu.CompilerParams(
            dimension_semantics=("parallel",),
            vmem_limit_bytes=32 * 1024 * 1024),   # safe on v5e/v6e (128 MiB) and v7x (64 MiB)
    )(xp, w1, wstack, vec)

    # TODO(synk): downstream consumers that tolerate the padded layout should
    # take `fused` directly and skip these slice copies.
    feats = fused[:n, :out_dim]
    logits = fused[:n, P:P + num_classes]
    return logits, feats


# ---------------- parameter init (matches the PyTorch module) ----------------

def xavier_uniform(key, fan_in, fan_out):
    bound = np.sqrt(6.0 / (fan_in + fan_out))
    # stored as (in, out) so the kernel computes x @ W
    return jax.random.uniform(key, (fan_in, fan_out), jnp.float32, -bound, bound)


def linear_bias(key, fan_in, fan_out):
    bound = 1.0 / np.sqrt(fan_in)
    return jax.random.uniform(key, (1, fan_out), jnp.float32, -bound, bound)


def init_params(key, in_dim, out_dim, num_classes):
    h1, h2 = in_dim // 2, in_dim // 4
    k1, k2, k3, k4, k5, k6, k7, k8 = jax.random.split(key, 8)
    w1 = xavier_uniform(k1, in_dim, h1)
    b1 = linear_bias(k2, in_dim, h1)
    w2 = xavier_uniform(k3, h1, h2)
    b2 = linear_bias(k4, h1, h2)
    w3 = xavier_uniform(k5, h2, out_dim)
    b3 = linear_bias(k6, h2, out_dim)
    gamma = jnp.ones((1, out_dim), jnp.float32)    # nn.LayerNorm default weight
    beta = jnp.zeros((1, out_dim), jnp.float32)    # nn.LayerNorm default bias
    wh = xavier_uniform(k7, out_dim, num_classes)
    bh = linear_bias(k8, out_dim, num_classes)
    return (w1, b1, w2, b2, w3, b3, gamma, beta, wh, bh)


def reference_forward(x, params):
    """Pure-JAX reference with the same mixed precision the kernel uses
    (bf16 matmul operands, f32 accumulation and f32 LayerNorm math)."""
    w1, b1, w2, b2, w3, b3, gamma, beta, wh, bh = params
    bf16 = jnp.bfloat16

    def mm(a, w):
        return jnp.dot(a.astype(bf16), w.astype(bf16),
                       preferred_element_type=jnp.float32)

    h = jnp.maximum(mm(x, w1) + b1, 0.0)
    h = jnp.maximum(mm(h, w2) + b2, 0.0)
    h = jnp.maximum(mm(h, w3) + b3, 0.0)
    mean = jnp.mean(h, axis=-1, keepdims=True)
    var = jnp.mean((h - mean) ** 2, axis=-1, keepdims=True)
    feats = (h - mean) * lax.rsqrt(var + 1e-5) * gamma + beta
    logits = mm(feats, wh) + bh
    return logits, feats


if __name__ == "__main__":
    in_dim, out_dim, num_classes = 32, 16, 10
    batch = 512          # 2 full 256-row tiles -> 2 parallel grid steps

    key = jax.random.PRNGKey(0)
    kx, kp = jax.random.split(key)
    x = jax.random.normal(kx, (batch, in_dim), jnp.float32)
    params = init_params(kp, in_dim, out_dim, num_classes)

    padded_params, odim, nclasses = pad_params(params)

    # Feed x in bf16 (halves the dominant input DMA stream); all accumulation
    # and LN math inside the kernel stays f32.
    logits, feats = adapter_classifier(
        x.astype(jnp.bfloat16), padded_params,
        out_dim=odim, num_classes=nclasses)
    logits = jax.block_until_ready(logits)
    feats = jax.block_until_ready(feats)

    ref_logits, ref_feats = reference_forward(x, params)
    np.testing.assert_allclose(np.asarray(feats), np.asarray(ref_feats),
                               rtol=5e-3, atol=5e-3)
    np.testing.assert_allclose(np.asarray(logits), np.asarray(ref_logits),
                               rtol=5e-3, atol=5e-3)

    print("KERNEL_OK")
</pallas_src>

<mosaic_0001>
module attributes {stable_mosaic.version = 11 : i64} {
  func.func @adapter_classifier_kernel(%arg0: i32, %arg1: memref<256x32xbf16, #tpu.memory_space<vmem>>, %arg2: memref<32x128xbf16, #tpu.memory_space<vmem>>, %arg3: memref<3x128x128xbf16, #tpu.memory_space<vmem>>, %arg4: memref<6x128xf32, #tpu.memory_space<vmem>>, %arg5: memref<256x256xf32, #tpu.memory_space<vmem>>) attributes {dimension_semantics = [#tpu.dimension_semantics<parallel>], iteration_bounds = array<i64: 2>, scalar_prefetch = 0 : i64, scratch_operands = 0 : i64, tpu.core_type = #tpu.core_type<tc>, window_params = [{transform_indices = @transform_0, window_bounds = array<i64: 256, 32>}, {pipeline_mode = #tpu.pipeline_mode<synchronous>, transform_indices = @transform_1, window_bounds = array<i64: 32, 128>}, {pipeline_mode = #tpu.pipeline_mode<synchronous>, transform_indices = @transform_2, window_bounds = array<i64: 3, 128, 128>}, {pipeline_mode = #tpu.pipeline_mode<synchronous>, transform_indices = @transform_3, window_bounds = array<i64: 6, 128>}, {transform_indices = @transform_4, window_bounds = array<i64: 256, 256>}]} {
    %c0 = arith.constant 0 : index
    %c0_0 = arith.constant 0 : index
    %0 = vector.load %arg1[%c0, %c0_0] : memref<256x32xbf16, #tpu.memory_space<vmem>>, vector<256x32xbf16>
    %c0_1 = arith.constant 0 : index
    %c0_2 = arith.constant 0 : index
    %1 = vector.load %arg4[%c0_1, %c0_2] : memref<6x128xf32, #tpu.memory_space<vmem>>, vector<1x128xf32>
    %c1 = arith.constant 1 : index
    %c0_3 = arith.constant 0 : index
    %2 = vector.load %arg4[%c1, %c0_3] : memref<6x128xf32, #tpu.memory_space<vmem>>, vector<1x128xf32>
    %c2 = arith.constant 2 : index
    %c0_4 = arith.constant 0 : index
    %3 = vector.load %arg4[%c2, %c0_4] : memref<6x128xf32, #tpu.memory_space<vmem>>, vector<1x128xf32>
    %c3 = arith.constant 3 : index
    %c0_5 = arith.constant 0 : index
    %4 = vector.load %arg4[%c3, %c0_5] : memref<6x128xf32, #tpu.memory_space<vmem>>, vector<1x128xf32>
    %c4 = arith.constant 4 : index
    %c0_6 = arith.constant 0 : index
    %5 = vector.load %arg4[%c4, %c0_6] : memref<6x128xf32, #tpu.memory_space<vmem>>, vector<1x128xf32>
    %c5 = arith.constant 5 : index
    %c0_7 = arith.constant 0 : index
    %6 = vector.load %arg4[%c5, %c0_7] : memref<6x128xf32, #tpu.memory_space<vmem>>, vector<1x128xf32>
    %c0_8 = arith.constant 0 : index
    %c0_9 = arith.constant 0 : index
    %7 = vector.load %arg2[%c0_8, %c0_9] : memref<32x128xbf16, #tpu.memory_space<vmem>>, vector<32x128xbf16>
    %cst = arith.constant dense<0.000000e+00> : vector<256x128xf32>
    %8 = tpu.matmul %0, %7, %cst {dimension_numbers = #tpu.dot_dimension_numbers<[1], [0], [0], [1], [0, 0, 1, 1], [], []>} : vector<256x32xbf16>, vector<32x128xbf16>, vector<256x128xf32> -> vector<256x128xf32>
    %9 = vector.broadcast %1 : vector<1x128xf32> to vector<256x128xf32>
    %10 = arith.addf %8, %9 : vector<256x128xf32>
    %cst_10 = arith.constant 0.000000e+00 : f32
    %11 = vector.broadcast %cst_10 : f32 to vector<256x128xf32>
    %12 = arith.maximumf %10, %11 : vector<256x128xf32>
    %13 = arith.truncf %12 : vector<256x128xf32> to vector<256x128xbf16>
    %c0_11 = arith.constant 0 : index
    %c0_12 = arith.constant 0 : index
    %c0_13 = arith.constant 0 : index
    %14 = vector.load %arg3[%c0_11, %c0_12, %c0_13] : memref<3x128x128xbf16, #tpu.memory_space<vmem>>, vector<1x128x128xbf16>
    %15 = vector.shape_cast %14 : vector<1x128x128xbf16> to vector<128x128xbf16>
    %cst_14 = arith.constant dense<0.000000e+00> : vector<256x128xf32>
    %16 = tpu.matmul %13, %15, %cst_14 {dimension_numbers = #tpu.dot_dimension_numbers<[1], [0], [0], [1], [0, 0, 1, 1], [], []>} : vector<256x128xbf16>, vector<128x128xbf16>, vector<256x128xf32> -> vector<256x128xf32>
    %17 = vector.broadcast %2 : vector<1x128xf32> to vector<256x128xf32>
    %18 = arith.addf %16, %17 : vector<256x128xf32>
    %cst_15 = arith.constant 0.000000e+00 : f32
    %19 = vector.broadcast %cst_15 : f32 to vector<256x128xf32>
    %20 = arith.maximumf %18, %19 : vector<256x128xf32>
    %21 = arith.truncf %20 : vector<256x128xf32> to vector<256x128xbf16>
    %c1_16 = arith.constant 1 : index
    %c0_17 = arith.constant 0 : index
    %c0_18 = arith.constant 0 : index
    %22 = vector.load %arg3[%c1_16, %c0_17, %c0_18] : memref<3x128x128xbf16, #tpu.memory_space<vmem>>, vector<1x128x128xbf16>
    %23 = vector.shape_cast %22 : vector<1x128x128xbf16> to vector<128x128xbf16>
    %cst_19 = arith.constant dense<0.000000e+00> : vector<256x128xf32>
    %24 = tpu.matmul %21, %23, %cst_19 {dimension_numbers = #tpu.dot_dimension_numbers<[1], [0], [0], [1], [0, 0, 1, 1], [], []>} : vector<256x128xbf16>, vector<128x128xbf16>, vector<256x128xf32> -> vector<256x128xf32>
    %25 = vector.broadcast %3 : vector<1x128xf32> to vector<256x128xf32>
    %26 = arith.addf %24, %25 : vector<256x128xf32>
    %cst_20 = arith.constant 0.000000e+00 : f32
    %27 = vector.broadcast %cst_20 : f32 to vector<256x128xf32>
    %28 = arith.maximumf %26, %27 : vector<256x128xf32>
    %cst_21 = arith.constant dense<0.000000e+00> : vector<256xf32>
    %29 = vector.multi_reduction <add>, %28, %cst_21 [1] : vector<256x128xf32> to vector<256xf32>
    %30 = vector.shape_cast %29 : vector<256xf32> to vector<256x1xf32>
    %cst_22 = arith.constant 6.250000e-02 : f32
    %31 = vector.broadcast %cst_22 : f32 to vector<256x1xf32>
    %32 = arith.mulf %30, %31 : vector<256x1xf32>
    %33 = vector.broadcast %32 : vector<256x1xf32> to vector<256x128xf32>
    %34 = arith.subf %28, %33 : vector<256x128xf32>
    %35 = tpu.iota {dimensions = array<i32: 1>} : vector<256x128xi32>
    %c16_i32 = arith.constant 16 : i32
    %36 = vector.broadcast %c16_i32 : i32 to vector<256x128xi32>
    %37 = arith.cmpi slt, %35, %36 : vector<256x128xi32>
    %cst_23 = arith.constant 0.000000e+00 : f32
    %38 = vector.broadcast %cst_23 : f32 to vector<256x128xf32>
    %39 = arith.select %37, %34, %38 : vector<256x128xi1>, vector<256x128xf32>
    %40 = arith.mulf %39, %39 : vector<256x128xf32>
    %cst_24 = arith.constant dense<0.000000e+00> : vector<256xf32>
    %41 = vector.multi_reduction <add>, %40, %cst_24 [1] : vector<256x128xf32> to vector<256xf32>
    %42 = vector.shape_cast %41 : vector<256xf32> to vector<256x1xf32>
    %cst_25 = arith.constant 6.250000e-02 : f32
    %43 = vector.broadcast %cst_25 : f32 to vector<256x1xf32>
    %44 = arith.mulf %42, %43 : vector<256x1xf32>
    %cst_26 = arith.constant 9.99999974E-6 : f32
    %45 = vector.broadcast %cst_26 : f32 to vector<256x1xf32>
    %46 = arith.addf %44, %45 : vector<256x1xf32>
    %47 = math.rsqrt %46 : vector<256x1xf32>
    %48 = vector.broadcast %47 : vector<256x1xf32> to vector<256x128xf32>
    %49 = arith.mulf %34, %48 : vector<256x128xf32>
    %50 = vector.broadcast %4 : vector<1x128xf32> to vector<256x128xf32>
    %51 = arith.mulf %49, %50 : vector<256x128xf32>
    %52 = vector.broadcast %5 : vector<1x128xf32> to vector<256x128xf32>
    %53 = arith.addf %51, %52 : vector<256x128xf32>
    %54 = arith.truncf %53 : vector<256x128xf32> to vector<256x128xbf16>
    %c2_27 = arith.constant 2 : index
    %c0_28 = arith.constant 0 : index
    %c0_29 = arith.constant 0 : index
    %55 = vector.load %arg3[%c2_27, %c0_28, %c0_29] : memref<3x128x128xbf16, #tpu.memory_space<vmem>>, vector<1x128x128xbf16>
    %56 = vector.shape_cast %55 : vector<1x128x128xbf16> to vector<128x128xbf16>
    %cst_30 = arith.constant dense<0.000000e+00> : vector<256x128xf32>
    %57 = tpu.matmul %54, %56, %cst_30 {dimension_numbers = #tpu.dot_dimension_numbers<[1], [0], [0], [1], [0, 0, 1, 1], [], []>} : vector<256x128xbf16>, vector<128x128xbf16>, vector<256x128xf32> -> vector<256x128xf32>
    %58 = vector.broadcast %6 : vector<1x128xf32> to vector<256x128xf32>
    %59 = arith.addf %57, %58 : vector<256x128xf32>
    %c0_31 = arith.constant 0 : index
    %c0_32 = arith.constant 0 : index
    %60 = vector.load %arg5[%c0_31, %c0_32] : memref<256x256xf32, #tpu.memory_space<vmem>>, vector<256x128xf32>
    tpu.vector_store %arg5[%c0_31, %c0_32], %53 {strides = array<i32>} : memref<256x256xf32, #tpu.memory_space<vmem>>, vector<256x128xf32>,
    %c0_33 = arith.constant 0 : index
    %c128 = arith.constant 128 : index
    %61 = vector.load %arg5[%c0_33, %c128] : memref<256x256xf32, #tpu.memory_space<vmem>>, vector<256x128xf32>
    tpu.vector_store %arg5[%c0_33, %c128], %59 {strides = array<i32>} : memref<256x256xf32, #tpu.memory_space<vmem>>, vector<256x128xf32>,
    return
  }
  func.func @transform_0(%arg0: i32) -> (i32, i32) {
    %c0_i32 = arith.constant 0 : i32
    %c0_i32_0 = arith.constant 0 : i32
    return %arg0, %c0_i32 : i32, i32
  }
  func.func @transform_1(%arg0: i32) -> (i32, i32) {
    %c0_i32 = arith.constant 0 : i32
    %c0_i32_0 = arith.constant 0 : i32
    %c0_i32_1 = arith.constant 0 : i32
    return %c0_i32, %c0_i32_0 : i32, i32
  }
  func.func @transform_2(%arg0: i32) -> (i32, i32, i32) {
    %c0_i32 = arith.constant 0 : i32
    %c0_i32_0 = arith.constant 0 : i32
    %c0_i32_1 = arith.constant 0 : i32
    %c0_i32_2 = arith.constant 0 : i32
    return %c0_i32, %c0_i32_0, %c0_i32_1 : i32, i32, i32
  }
  func.func @transform_3(%arg0: i32) -> (i32, i32) {
    %c0_i32 = arith.constant 0 : i32
    %c0_i32_0 = arith.constant 0 : i32
    %c0_i32_1 = arith.constant 0 : i32
    return %c0_i32, %c0_i32_0 : i32, i32
  }
  func.func @transform_4(%arg0: i32) -> (i32, i32) {
    %c0_i32 = arith.constant 0 : i32
    %c0_i32_0 = arith.constant 0 : i32
    return %arg0, %c0_i32 : i32, i32
  }
}

</mosaic_0001>

<llo_original>
// kernel: adapter_classifier.1
$region0: #{adapter_classifier.1}
  #allocation0 [shape = 'u32[]', space=smem, size = 0x4, offset = 0x4, fixed_abs, tag = 'smem constant byte address 0x4 - core index']
  #allocation1 [shape = 'u32[144,128]{1,0:T(1,128)}', space=vmem, size = 0x12000, scoped, tag = 'internal scratch']
  %s0 = inlined_call_operand.vmem [shape: bf16[512,32], index: 0, kind: input, shape index: {}]
  %s1 = inlined_call_operand.vmem [shape: bf16[32,128], index: 1, kind: input, shape index: {}]
  %s2 = inlined_call_operand.vmem [shape: bf16[3,128,128], index: 2, kind: input, shape index: {}]
  %s3 = inlined_call_operand.vmem [shape: f32[6,128], index: 3, kind: input, shape index: {}]
  %s4 = inlined_call_operand.vmem [shape: f32[512,256], index: 4, kind: output, shape index: {}]
  %s5 = sld [smem:[#allocation0]]
  $region49: #{adapter_classifier.1} parent=0
    _
  %s7 = ssub.s32 1, %s5
  %s8 = scalar_select 0, %s7, %s5
  loop: start=0, step=1, limit=4
  $region2: #{adapter_classifier.1} parent=0 // loop_pre_header
    _
  $region3: #{adapter_classifier.1} parent=0 // loop_header
    %s10 = sphi 0, %s14
    %p11 = scmp.ge.s32.totalorder %s10, 4
    %s20 = sphi 0, %s22
    %s23 = sphi 0, %s20
    %s24 = sphi 0, %s23
    %s40 = sphi 0, %s24
    %s44 = sphi 0, %s44
    %s46 = sphi 0, %s44
    %s47 = sphi 0, %s46
    %s61 = sphi 0, %s47
    %s65 = sphi 0, %s65
    %s67 = sphi 0, %s65
    %s68 = sphi 0, %s67
    %s82 = sphi 0, %s68
    %s86 = sphi 0, %s86
    %s88 = sphi 0, %s86
    %s89 = sphi 0, %s88
    %s103 = sphi 0, %s89
    %s109 = sphi 0, %s111
    %s112 = sphi 0, %s109
    %s113 = sphi 0, %s112
    %s129 = sphi 0, %s113
  $region4: #{adapter_classifier.1} parent=0 // loop_header_branch
    %13 = sbr.rel (%p11) target = $region8
  $region5: #{adapter_classifier.1} parent=0 // loop_body
    %s15 = ssub.s32 %s10, 1
    %s16 = ssub.s32 %s10, 2
    %s17 = sadd.s32 %s10, 1
    %s18 = ssub.s32 %s10, %s17
    %p19 = scmp.eq.s32.totalorder %s18, 0
    %s21 = sadd.s32 %s20, 1
    %s22 = scalar_select %p19, %s20, %s21
    %p25 = pneg %p19
    %p26 = scmp.eq.s32.totalorder %s10, 1
    %p27 = por %p25, %p26
    %p28 = scmp.ne.s32.totalorder %s20, %s23
    %p29 = scmp.eq.s32.totalorder %s10, 0
    %p30 = por %p28, %p29
    %p31 = scmp.ne.s32.totalorder %s20, %s23
    %p32 = scmp.eq.s32.totalorder %s15, 1
    %p33 = por %p31, %p32
    %p34 = scmp.ne.s32.totalorder %s23, %s24
    %p35 = scmp.eq.s32.totalorder %s15, 0
    %p36 = por %p34, %p35
    %p37 = scmp.ne.s32.totalorder %s23, %s24
    %p38 = scmp.eq.s32.totalorder %s16, 1
    %p39 = por %p37, %p38
    %p41 = scmp.ne.s32.totalorder %s24, %s40
    %p42 = scmp.eq.s32.totalorder %s16, 0
    %p43 = por %p41, %p42
    %s45 = sadd.s32 %s44, 1
    %p48 = scmp.eq.s32.totalorder %s10, 1
    %p49 = scmp.ne.s32.totalorder %s44, %s46
    %p50 = scmp.eq.s32.totalorder %s10, 0
    %p51 = por %p49, %p50
    %p52 = scmp.ne.s32.totalorder %s44, %s46
    %p53 = scmp.eq.s32.totalorder %s15, 1
    %p54 = por %p52, %p53
    %p55 = scmp.ne.s32.totalorder %s46, %s47
    %p56 = scmp.eq.s32.totalorder %s15, 0
    %p57 = por %p55, %p56
    %p58 = scmp.ne.s32.totalorder %s46, %s47
    %p59 = scmp.eq.s32.totalorder %s16, 1
    %p60 = por %p58, %p59
    %p62 = scmp.ne.s32.totalorder %s47, %s61
    %p63 = scmp.eq.s32.totalorder %s16, 0
    %p64 = por %p62, %p63
    %s66 = sadd.s32 %s65, 1
    %p69 = scmp.eq.s32.totalorder %s10, 1
    %p70 = scmp.ne.s32.totalorder %s65, %s67
    %p71 = scmp.eq.s32.totalorder %s10, 0
    %p72 = por %p70, %p71
    %p73 = scmp.ne.s32.totalorder %s65, %s67
    %p74 = scmp.eq.s32.totalorder %s15, 1
    %p75 = por %p73, %p74
    %p76 = scmp.ne.s32.totalorder %s67, %s68
    %p77 = scmp.eq.s32.totalorder %s15, 0
    %p78 = por %p76, %p77
    %p79 = scmp.ne.s32.totalorder %s67, %s68
    %p80 = scmp.eq.s32.totalorder %s16, 1
    %p81 = por %p79, %p80
    %p83 = scmp.ne.s32.totalorder %s68, %s82
    %p84 = scmp.eq.s32.totalorder %s16, 0
    %p85 = por %p83, %p84
    %s87 = sadd.s32 %s86, 1
    %p90 = scmp.eq.s32.totalorder %s10, 1
    %p91 = scmp.ne.s32.totalorder %s86, %s88
    %p92 = scmp.eq.s32.totalorder %s10, 0
    %p93 = por %p91, %p92
    %p94 = scmp.ne.s32.totalorder %s86, %s88
    %p95 = scmp.eq.s32.totalorder %s15, 1
    %p96 = por %p94, %p95
    %p97 = scmp.ne.s32.totalorder %s88, %s89
    %p98 = scmp.eq.s32.totalorder %s15, 0
    %p99 = por %p97, %p98
    %p100 = scmp.ne.s32.totalorder %s88, %s89
    %p101 = scmp.eq.s32.totalorder %s16, 1
    %p102 = por %p100, %p101
    %p104 = scmp.ne.s32.totalorder %s89, %s103
    %p105 = scmp.eq.s32.totalorder %s16, 0
    %p106 = por %p104, %p105
    %s107 = ssub.s32 %s10, %s17
    %p108 = scmp.eq.s32.totalorder %s107, 0
    %s110 = sadd.s32 %s109, 1
    %s111 = scalar_select %p108, %s109, %s110
    %p114 = pneg %p108
    %p115 = scmp.eq.s32.totalorder %s10, 1
    %p116 = por %p114, %p115
    %p117 = scmp.ne.s32.totalorder %s109, %s112
    %p118 = scmp.eq.s32.totalorder %s10, 0
    %p119 = por %p117, %p118
    %p120 = scmp.ne.s32.totalorder %s109, %s112
    %p121 = scmp.eq.s32.totalorder %s15, 1
    %p122 = por %p120, %p121
    %p123 = scmp.ne.s32.totalorder %s112, %s113
    %p124 = scmp.eq.s32.totalorder %s15, 0
    %p125 = por %p123, %p124
    %p126 = scmp.ne.s32.totalorder %s112, %s113
    %p127 = scmp.eq.s32.totalorder %s16, 1
    %p128 = por %p126, %p127
    %p130 = scmp.ne.s32.totalorder %s113, %s129
    %p131 = scmp.eq.s32.totalorder %s16, 0
    %p132 = por %p130, %p131
    %p133 = scmp.le.s32.totalorder 1, %s10
    %p134 = scmp.lt.s32.totalorder %s10, 3
    %p135 = pnand %p133, %p134
    %p136 = pneg %p135
    // Predicated region
    $region9: #{adapter_classifier.1} parent=5 // pred_check
      _
    $region10: #{adapter_classifier.1} parent=5 // pred_check_branch
      %138 = sbr.rel (%p135) target = $region12
    $region11: #{adapter_classifier.1} parent=5 // pred_region
      %s139 = ssub.s32 %s10, 1
      // Predicated region
      $region13: #{adapter_classifier.1} parent=11 // pred_check
        %p140 = pneg %p57
      $region14: #{adapter_classifier.1} parent=11 // pred_check_branch
        %142 = sbr.rel (%p140) target = $region16
      $region15: #{adapter_classifier.1} parent=11 // pred_region
        _
      $region16: #{adapter_classifier.1} parent=11 // pred_fallthru
        _
      // Predicated region
      $region17: #{adapter_classifier.1} parent=11 // pred_check
        %p143 = pneg %p78
      $region18: #{adapter_classifier.1} parent=11 // pred_check_branch
        %145 = sbr.rel (%p143) target = $region20
      $region19: #{adapter_classifier.1} parent=11 // pred_region
        _
      $region20: #{adapter_classifier.1} parent=11 // pred_fallthru
        _
      // Predicated region
      $region21: #{adapter_classifier.1} parent=11 // pred_check
        %p146 = pneg %p99
      $region22: #{adapter_classifier.1} parent=11 // pred_check_branch
        %148 = sbr.rel (%p146) target = $region24
      $region23: #{adapter_classifier.1} parent=11 // pred_region
        _
      $region24: #{adapter_classifier.1} parent=11 // pred_fallthru
        _
    $region12: #{adapter_classifier.1} parent=5 // pred_fallthru
      _
    %p149 = scmp.lt.s32.totalorder %s10, 2
    // Predicated region
    $region25: #{adapter_classifier.1} parent=5 // pred_check
      %p150 = pneg %p149
    $region26: #{adapter_classifier.1} parent=5 // pred_check_branch
      %152 = sbr.rel (%p150) target = $region28
    $region27: #{adapter_classifier.1} parent=5 // pred_region
      // Predicated region
      $region29: #{adapter_classifier.1} parent=27 // pred_check
        %p153 = pneg %p30
      $region30: #{adapter_classifier.1} parent=27 // pred_check_branch
        %155 = sbr.rel (%p153) target = $region32
      $region31: #{adapter_classifier.1} parent=27 // pred_region
        %s156 = smul.u32 32, %s10
        %p157 = scmp.lt.s32.totalorder %s156, 63
        %s158 = scalar_select %p157, %s156, 63
        %s159 = smul.addr %s158, 4
        %s160 = scalar_lea.vmem %s0, %s159
        %s161 = smul.u32 32, %s10
      $region32: #{adapter_classifier.1} parent=27 // pred_fallthru
        _
    $region28: #{adapter_classifier.1} parent=5 // pred_fallthru
      _
    %p162 = scmp.le.s32.totalorder 1, %s10
    %p163 = scmp.lt.s32.totalorder %s10, 3
    %p164 = pnand %p162, %p163
    %p165 = pneg %p164
    // Predicated region
    $region33: #{adapter_classifier.1} parent=5 // pred_check
      _
    $region34: #{adapter_classifier.1} parent=5 // pred_check_branch
      %167 = sbr.rel (%p164) target = $region36
    $region35: #{adapter_classifier.1} parent=5 // pred_region
      %s168 = ssub.s32 %s10, 1
      %s169 = smul.u32 32, %s15
      %p170 = scmp.lt.s32.totalorder %s169, 63
      %s171 = scalar_select %p170, %s169, 63
      %s172 = smul.addr %s171, 4
      %s173 = scalar_lea.vmem %s0, %s172
      %p174 = pneg %p36
      %p175 = pneg %p33
      %p176 = pneg %p57
      %p177 = pneg %p54
      %p178 = pneg %p78
      %p179 = pneg %p75
      %p180 = pneg %p99
      %p181 = pneg %p96
      %p182 = pneg %p125
      %p183 = pneg %p122
      %s184 = smul.u32 32, %s15
      %p185 = scmp.lt.s32.totalorder %s184, 63
      %s186 = scalar_select %p185, %s184, 63
      %s187 = smul.addr %s186, 2
      %s188 = smul.addr %s187, 8
      %s189 = scalar_lea.vmem %s4, %s188
      %s190 = smul.u32 32, %s15
      %p191 = scmp.lt.s32.totalorder %s190, 63
      %s192 = scalar_select %p191, %s190, 63
      %s193 = smul.addr %s192, 4
      %s194 = scalar_lea.vmem %s0, %s193
      %s195 = smul.u32 32, %s15
      %s196 = smul.u32 32, %s15
      %p197 = scmp.lt.s32.totalorder %s196, 63
      %s198 = scalar_select %p197, %s196, 63
      %s199 = smul.addr %s198, 2
      %s200 = smul.addr %s199, 8
      %s201 = scalar_lea.vmem %s4, %s200
      %s202 = smul.u32 32, %s15
      %v204 = vld [vmem:[%s194] sm:$0xf]
      %v205 = vld [vmem:[%s194 + $0x4] sm:$0xf]
      %v206 = vld [vmem:[%s194 + $0x8] sm:$0xf]
      %v207 = vld [vmem:[%s194 + $0xc] sm:$0xf]
      %v208 = vld [vmem:[%s194 + $0x10] sm:$0xf]
      %v209 = vld [vmem:[%s194 + $0x14] sm:$0xf]
      %v210 = vld [vmem:[%s194 + $0x18] sm:$0xf]
      %v211 = vld [vmem:[%s194 + $0x1c] sm:$0xf]
      %v212 = vld [vmem:[%s194 + $0x20] sm:$0xf]
      %v213 = vld [vmem:[%s194 + $0x24] sm:$0xf]
      %v214 = vld [vmem:[%s194 + $0x28] sm:$0xf]
      %v215 = vld [vmem:[%s194 + $0x2c] sm:$0xf]
      %v216 = vld [vmem:[%s194 + $0x30] sm:$0xf]
      %v217 = vld [vmem:[%s194 + $0x34] sm:$0xf]
      %v218 = vld [vmem:[%s194 + $0x38] sm:$0xf]
      %v219 = vld [vmem:[%s194 + $0x3c] sm:$0xf]
      %v220 = vld [vmem:[%s194 + $0x40] sm:$0xf]
      %v221 = vld [vmem:[%s194 + $0x44] sm:$0xf]
      %v222 = vld [vmem:[%s194 + $0x48] sm:$0xf]
      %v223 = vld [vmem:[%s194 + $0x4c] sm:$0xf]
      %v224 = vld [vmem:[%s194 + $0x50] sm:$0xf]
      %v225 = vld [vmem:[%s194 + $0x54] sm:$0xf]
      %v226 = vld [vmem:[%s194 + $0x58] sm:$0xf]
      %v227 = vld [vmem:[%s194 + $0x5c] sm:$0xf]
      %v228 = vld [vmem:[%s194 + $0x60] sm:$0xf]
      %v229 = vld [vmem:[%s194 + $0x64] sm:$0xf]
      %v230 = vld [vmem:[%s194 + $0x68] sm:$0xf]
      %v231 = vld [vmem:[%s194 + $0x6c] sm:$0xf]
      %v232 = vld [vmem:[%s194 + $0x70] sm:$0xf]
      %v233 = vld [vmem:[%s194 + $0x74] sm:$0xf]
      %v234 = vld [vmem:[%s194 + $0x78] sm:$0xf]
      %v235 = vld [vmem:[%s194 + $0x7c] sm:$0xf]
      %v236 = vld [vmem:[%s3] sm:$0x1]
      %v237 = vld [vmem:[%s3 + $0x1] sm:$0x1]
      %v238 = vld [vmem:[%s3 + $0x2] sm:$0x1]
      %v239 = vld [vmem:[%s3 + $0x3] sm:$0x1]
      %v240 = vld [vmem:[%s3 + $0x4] sm:$0x1]
      %v241 = vld [vmem:[%s3 + $0x5] sm:$0x1]
      %v242 = vld [vmem:[%s1] sm:$0xf]
      %v243 = vld [vmem:[%s1 + $0x4] sm:$0xf]
      %v244 = vld [vmem:[%s1 + $0x8] sm:$0xf]
      %v245 = vld [vmem:[%s1 + $0xc] sm:$0xf]
      %v246 = vlaneseq
      %v247 = vshrl.u32 %v246, 7
      %v248 = vsub.s32 0, %v247
      %v249 = vrot.slane %v236, %v248
      %v282 = vunpack.c.l.b16 %v204
      %v283 = vunpack.c.l.b16 %v205
      %v284 = vunpack.c.l.b16 %v206
      %v285 = vunpack.c.l.b16 %v207
      %v286 = vunpack.c.l.b16 %v208
      %v287 = vunpack.c.l.b16 %v209
      %v288 = vunpack.c.l.b16 %v210
      %v289 = vunpack.c.l.b16 %v211
      %v290 = vunpack.c.l.b16 %v212
      %v291 = vunpack.c.l.b16 %v213
      %v292 = vunpack.c.l.b16 %v214
      %v293 = vunpack.c.l.b16 %v215
      %v294 = vunpack.c.l.b16 %v216
      %v295 = vunpack.c.l.b16 %v217
      %v296 = vunpack.c.l.b16 %v218
      %v297 = vunpack.c.l.b16 %v219
      %v298 = vunpack.c.l.b16 %v220
      %v299 = vunpack.c.l.b16 %v221
      %v300 = vunpack.c.l.b16 %v222
      %v301 = vunpack.c.l.b16 %v223
      %v302 = vunpack.c.l.b16 %v224
      %v303 = vunpack.c.l.b16 %v225
      %v304 = vunpack.c.l.b16 %v226
      %v305 = vunpack.c.l.b16 %v227
      %v306 = vunpack.c.l.b16 %v228
      %v307 = vunpack.c.l.b16 %v229
      %v308 = vunpack.c.l.b16 %v230
      %v309 = vunpack.c.l.b16 %v231
      %v310 = vunpack.c.l.b16 %v232
      %v311 = vunpack.c.l.b16 %v233
      %v312 = vunpack.c.l.b16 %v234
      %v313 = vunpack.c.l.b16 %v235
      %v314 = vpack.c.b16 %v283, %v282
      %v315 = vpack.c.b16 %v285, %v284
      %v316 = vpack.c.b16 %v287, %v286
      %v317 = vpack.c.b16 %v289, %v288
      %v318 = vpack.c.b16 %v291, %v290
      %v319 = vpack.c.b16 %v293, %v292
      %v320 = vpack.c.b16 %v295, %v294
      %v321 = vpack.c.b16 %v297, %v296
      %v322 = vpack.c.b16 %v299, %v298
      %v323 = vpack.c.b16 %v301, %v300
      %v324 = vpack.c.b16 %v303, %v302
      %v325 = vpack.c.b16 %v305, %v304
      %v326 = vpack.c.b16 %v307, %v306
      %v327 = vpack.c.b16 %v309, %v308
      %v328 = vpack.c.b16 %v311, %v310
      %v329 = vpack.c.b16 %v313, %v312
      %v334 = vunpack.c.l.b16 %v242
      %v335 = vunpack.c.l.b16 %v243
      %v336 = vunpack.c.l.b16 %v244
      %v337 = vunpack.c.l.b16 %v245
      %v338 = vpack.c.b16 %v335, %v334
      %v339 = vpack.c.b16 %v337, %v336
      %vm342 = vcmask 261120
      %v344 = vsel %vm342, %v314, 0
      %v347 = vsel %vm342, %v315, 0
      %v350 = vsel %vm342, %v316, 0
      %v353 = vsel %vm342, %v317, 0
      %v356 = vsel %vm342, %v318, 0
      %v359 = vsel %vm342, %v319, 0
      %v362 = vsel %vm342, %v320, 0
      %v365 = vsel %vm342, %v321, 0
      %v368 = vsel %vm342, %v322, 0
      %v371 = vsel %vm342, %v323, 0
      %v374 = vsel %vm342, %v324, 0
      %v377 = vsel %vm342, %v325, 0
      %v380 = vsel %vm342, %v326, 0
      %v383 = vsel %vm342, %v327, 0
      %v386 = vsel %vm342, %v328, 0
      %v389 = vsel %vm342, %v329, 0
      %391 = vmatprep.subr.bf16.mxu0 0
      %392 = vmatpush1.bf16.msra.mxu0 %v338
      %393 = vmatprep.subr.bf16.mxu0 0
      %394 = vmatpush1.bf16.msra.mxu0 %v339
      %395 = vmatprep.subr.bf16.mxu0 0
      %396 = vmatpush1.bf16.msra.mxu0 0
      %397 = vmatprep.subr.bf16.mxu0 0
      %398 = vmatpush1.bf16.msra.mxu0 0
      %399 = vmatprep.subr.bf16.mxu0 0
      %400 = vmatpush1.bf16.msra.mxu0 0
      %401 = vmatprep.subr.bf16.mxu0 0
      %402 = vmatpush1.bf16.msra.mxu0 0
      %403 = vmatprep.subr.bf16.mxu0 0
      %404 = vmatpush1.bf16.msra.mxu0 0
      %405 = vmatprep.subr.bf16.mxu0 0
      %406 = vmatpush1.bf16.msra.mxu0 0
      %407 = vmatprep.subr.bf16.mxu0 0
      %408 = vmatpush1.bf16.msra.mxu0 0
      %409 = vmatprep.subr.bf16.mxu0 0
      %410 = vmatpush1.bf16.msra.mxu0 0
      %411 = vmatprep.subr.bf16.mxu0 0
      %412 = vmatpush1.bf16.msra.mxu0 0
      %413 = vmatprep.subr.bf16.mxu0 0
      %414 = vmatpush1.bf16.msra.mxu0 0
      %415 = vmatprep.subr.bf16.mxu0 0
      %416 = vmatpush1.bf16.msra.mxu0 0
      %417 = vmatprep.subr.bf16.mxu0 0
      %418 = vmatpush1.bf16.msra.mxu0 0
      %419 = vmatprep.subr.bf16.mxu0 0
      %420 = vmatpush1.bf16.msra.mxu0 0
      %421 = vmatprep.subr.bf16.mxu0 0
      %422 = vmatpush1.bf16.msra.mxu0 0
      %423 = vmatprep.mubr.bf16.mxu0 0
      %424 = vmatmul.mubr.bf16.gmra.mrb[0].mxu0 %v344
      %v425 = vpop.f32.mrb[0].mxu0
      %v426 = vadd.f32 %v249, %v425
      %v427 = vpop.f32.mrb[0].mxu0
      %v428 = vpop.f32.mrb[0].mxu0
      %v429 = vadd.f32 %v249, %v428
      %v430 = vpop.f32.mrb[0].mxu0
      %431 = vmatprep.mubr.bf16.mxu0 0
      %432 = vmatmul.mubr.bf16.gmra.mrb[0].mxu0 %v347
      %v433 = vpop.f32.mrb[0].mxu0
      %v434 = vadd.f32 %v249, %v433
      %v435 = vpop.f32.mrb[0].mxu0
      %v436 = vpop.f32.mrb[0].mxu0
      %v437 = vadd.f32 %v249, %v436
      %v438 = vpop.f32.mrb[0].mxu0
      %439 = vmatprep.mubr.bf16.mxu0 0
      %440 = vmatmul.mubr.bf16.gmra.mrb[0].mxu0 %v350
      %v441 = vpop.f32.mrb[0].mxu0
      %v442 = vadd.f32 %v249, %v441
      %v443 = vpop.f32.mrb[0].mxu0
      %v444 = vpop.f32.mrb[0].mxu0
      %v445 = vadd.f32 %v249, %v444
      %v446 = vpop.f32.mrb[0].mxu0
      %447 = vmatprep.mubr.bf16.mxu0 0
      %448 = vmatmul.mubr.bf16.gmra.mrb[0].mxu0 %v353
      %v449 = vpop.f32.mrb[0].mxu0
      %v450 = vadd.f32 %v249, %v449
      %v451 = vpop.f32.mrb[0].mxu0
      %v452 = vpop.f32.mrb[0].mxu0
      %v453 = vadd.f32 %v249, %v452
      %v454 = vpop.f32.mrb[0].mxu0
      %455 = vmatprep.mubr.bf16.mxu0 0
      %456 = vmatmul.mubr.bf16.gmra.mrb[0].mxu0 %v356
      %v457 = vpop.f32.mrb[0].mxu0
      %v458 = vadd.f32 %v249, %v457
      %v459 = vpop.f32.mrb[0].mxu0
      %v460 = vpop.f32.mrb[0].mxu0
      %v461 = vadd.f32 %v249, %v460
      %v462 = vpop.f32.mrb[0].mxu0
      %463 = vmatprep.mubr.bf16.mxu0 0
      %464 = vmatmul.mubr.bf16.gmra.mrb[0].mxu0 %v359
      %v465 = vpop.f32.mrb[0].mxu0
      %v466 = vadd.f32 %v249, %v465
      %v467 = vpop.f32.mrb[0].mxu0
      %v468 = vpop.f32.mrb[0].mxu0
      %v469 = vadd.f32 %v249, %v468
      %v470 = vpop.f32.mrb[0].mxu0
      %471 = vmatprep.mubr.bf16.mxu0 0
      %472 = vmatmul.mubr.bf16.gmra.mrb[0].mxu0 %v362
      %v473 = vpop.f32.mrb[0].mxu0
      %v474 = vadd.f32 %v249, %v473
      %v475 = vpop.f32.mrb[0].mxu0
      %v476 = vpop.f32.mrb[0].mxu0
      %v477 = vadd.f32 %v249, %v476
      %v478 = vpop.f32.mrb[0].mxu0
      %479 = vmatprep.mubr.bf16.mxu0 0
      %480 = vmatmul.mubr.bf16.gmra.mrb[0].mxu0 %v365
      %v481 = vpop.f32.mrb[0].mxu0
      %v482 = vadd.f32 %v249, %v481
      %v483 = vpop.f32.mrb[0].mxu0
      %v484 = vpop.f32.mrb[0].mxu0
      %v485 = vadd.f32 %v249, %v484
      %v486 = vpop.f32.mrb[0].mxu0
      %487 = vmatprep.mubr.bf16.mxu0 0
      %488 = vmatmul.mubr.bf16.gmra.mrb[0].mxu0 %v368
      %v489 = vpop.f32.mrb[0].mxu0
      %v490 = vadd.f32 %v249, %v489
      %v491 = vpop.f32.mrb[0].mxu0
      %v492 = vpop.f32.mrb[0].mxu0
      %v493 = vadd.f32 %v249, %v492
      %v494 = vpop.f32.mrb[0].mxu0
      %495 = vmatprep.mubr.bf16.mxu0 0
      %496 = vmatmul.mubr.bf16.gmra.mrb[0].mxu0 %v371
      %v497 = vpop.f32.mrb[0].mxu0
      %v498 = vadd.f32 %v249, %v497
      %v499 = vpop.f32.mrb[0].mxu0
      %v500 = vpop.f32.mrb[0].mxu0
      %v501 = vadd.f32 %v249, %v500
      %v502 = vpop.f32.mrb[0].mxu0
      %503 = vmatprep.mubr.bf16.mxu0 0
      %504 = vmatmul.mubr.bf16.gmra.mrb[0].mxu0 %v374
      %v505 = vpop.f32.mrb[0].mxu0
      %v506 = vadd.f32 %v249, %v505
      %v507 = vpop.f32.mrb[0].mxu0
      %v508 = vpop.f32.mrb[0].mxu0
      %v509 = vadd.f32 %v249, %v508
      %v510 = vpop.f32.mrb[0].mxu0
      %511 = vmatprep.mubr.bf16.mxu0 0
      %512 = vmatmul.mubr.bf16.gmra.mrb[0].mxu0 %v377
      %v513 = vpop.f32.mrb[0].mxu0
      %v514 = vadd.f32 %v249, %v513
      %v515 = vpop.f32.mrb[0].mxu0
      %v516 = vpop.f32.mrb[0].mxu0
      %v517 = vadd.f32 %v249, %v516
      %v518 = vpop.f32.mrb[0].mxu0
      %519 = vmatprep.mubr.bf16.mxu0 0
      %520 = vmatmul.mubr.bf16.gmra.mrb[0].mxu0 %v380
      %v521 = vpop.f32.mrb[0].mxu0
      %v522 = vadd.f32 %v249, %v521
      %v523 = vpop.f32.mrb[0].mxu0
      %v524 = vpop.f32.mrb[0].mxu0
      %v525 = vadd.f32 %v249, %v524
      %v526 = vpop.f32.mrb[0].mxu0
      %527 = vmatprep.mubr.bf16.mxu0 0
      %528 = vmatmul.mubr.bf16.gmra.mrb[0].mxu0 %v383
      %v529 = vpop.f32.mrb[0].mxu0
      %v530 = vadd.f32 %v249, %v529
      %v531 = vpop.f32.mrb[0].mxu0
      %v532 = vpop.f32.mrb[0].mxu0
      %v533 = vadd.f32 %v249, %v532
      %v534 = vpop.f32.mrb[0].mxu0
      %535 = vmatprep.mubr.bf16.mxu0 0
      %536 = vmatmul.mubr.bf16.gmra.mrb[0].mxu0 %v386
      %v537 = vpop.f32.mrb[0].mxu0
      %v538 = vadd.f32 %v249, %v537
      %v539 = vpop.f32.mrb[0].mxu0
      %v540 = vpop.f32.mrb[0].mxu0
      %v541 = vadd.f32 %v249, %v540
      %v542 = vpop.f32.mrb[0].mxu0
      %543 = vmatprep.mubr.bf16.mxu0 0
      %544 = vmatmul.mubr.bf16.gmra.mrb[0].mxu0 %v389
      %v545 = vpop.f32.mrb[0].mxu0
      %v546 = vadd.f32 %v249, %v545
      %v547 = vpop.f32.mrb[0].mxu0
      %v548 = vpop.f32.mrb[0].mxu0
      %v549 = vadd.f32 %v249, %v548
      %v550 = vpop.f32.mrb[0].mxu0
      %551 = vdwg.mxu0
      %v552 = vmax.f32 %v426, 0.0
      %v553 = vmax.f32 %v429, 0.0
      %v554 = vmax.f32 %v434, 0.0
      %v555 = vmax.f32 %v437, 0.0
      %v556 = vmax.f32 %v442, 0.0
      %v557 = vmax.f32 %v445, 0.0
      %v558 = vmax.f32 %v450, 0.0
      %v559 = vmax.f32 %v453, 0.0
      %v560 = vmax.f32 %v458, 0.0
      %v561 = vmax.f32 %v461, 0.0
      %v562 = vmax.f32 %v466, 0.0
      %v563 = vmax.f32 %v469, 0.0
      %v564 = vmax.f32 %v474, 0.0
      %v565 = vmax.f32 %v477, 0.0
      %v566 = vmax.f32 %v482, 0.0
      %v567 = vmax.f32 %v485, 0.0
      %v568 = vmax.f32 %v490, 0.0
      %v569 = vmax.f32 %v493, 0.0
      %v570 = vmax.f32 %v498, 0.0
      %v571 = vmax.f32 %v501, 0.0
      %v572 = vmax.f32 %v506, 0.0
      %v573 = vmax.f32 %v509, 0.0
      %v574 = vmax.f32 %v514, 0.0
      %v575 = vmax.f32 %v517, 0.0
      %v576 = vmax.f32 %v522, 0.0
      %v577 = vmax.f32 %v525, 0.0
      %v578 = vmax.f32 %v530, 0.0
      %v579 = vmax.f32 %v533, 0.0
      %v580 = vmax.f32 %v538, 0.0
      %v581 = vmax.f32 %v541, 0.0
      %v582 = vmax.f32 %v546, 0.0
      %v583 = vmax.f32 %v549, 0.0
      %v584 = vpack.c.bf16 %v553, %v552
      %v585 = vpack.c.bf16 %v555, %v554
      %v586 = vpack.c.bf16 %v557, %v556
      %v587 = vpack.c.bf16 %v559, %v558
      %v588 = vpack.c.bf16 %v561, %v560
      %v589 = vpack.c.bf16 %v563, %v562
      %v590 = vpack.c.bf16 %v565, %v564
      %v591 = vpack.c.bf16 %v567, %v566
      %v592 = vpack.c.bf16 %v569, %v568
      %v593 = vpack.c.bf16 %v571, %v570
      %v594 = vpack.c.bf16 %v573, %v572
      %v595 = vpack.c.bf16 %v575, %v574
      %v596 = vpack.c.bf16 %v577, %v576
      %v597 = vpack.c.bf16 %v579, %v578
      %v598 = vpack.c.bf16 %v581, %v580
      %v599 = vpack.c.bf16 %v583, %v582
      %v600 = vld [vmem:[%s2] sm:$0xf]
      %v601 = vld [vmem:[%s2 + $0x4] sm:$0xf]
      %v602 = vld [vmem:[%s2 + $0x8] sm:$0xf]
      %v603 = vld [vmem:[%s2 + $0xc] sm:$0xf]
      %v604 = vld [vmem:[%s2 + $0x10] sm:$0xf]
      %v605 = vld [vmem:[%s2 + $0x14] sm:$0xf]
      %v606 = vld [vmem:[%s2 + $0x18] sm:$0xf]
      %v607 = vld [vmem:[%s2 + $0x1c] sm:$0xf]
      %v608 = vld [vmem:[%s2 + $0x20] sm:$0xf]
      %v609 = vld [vmem:[%s2 + $0x24] sm:$0xf]
      %v610 = vld [vmem:[%s2 + $0x28] sm:$0xf]
      %v611 = vld [vmem:[%s2 + $0x2c] sm:$0xf]
      %v612 = vld [vmem:[%s2 + $0x30] sm:$0xf]
      %v613 = vld [vmem:[%s2 + $0x34] sm:$0xf]
      %v614 = vld [vmem:[%s2 + $0x38] sm:$0xf]
      %v615 = vld [vmem:[%s2 + $0x3c] sm:$0xf]
      %v616 = vlaneseq
      %v617 = vshrl.u32 %v616, 7
      %v618 = vsub.s32 0, %v617
      %v619 = vrot.slane %v237, %v618
      %v636 = vunpack.c.l.b16 %v600
      %v637 = vunpack.c.l.b16 %v601
      %v638 = vunpack.c.l.b16 %v602
      %v639 = vunpack.c.l.b16 %v603
      %v640 = vunpack.c.l.b16 %v604
      %v641 = vunpack.c.l.b16 %v605
      %v642 = vunpack.c.l.b16 %v606
      %v643 = vunpack.c.l.b16 %v607
      %v644 = vunpack.c.l.b16 %v608
      %v645 = vunpack.c.l.b16 %v609
      %v646 = vunpack.c.l.b16 %v610
      %v647 = vunpack.c.l.b16 %v611
      %v648 = vunpack.c.l.b16 %v612
      %v649 = vunpack.c.l.b16 %v613
      %v650 = vunpack.c.l.b16 %v614
      %v651 = vunpack.c.l.b16 %v615
      %v652 = vpack.c.b16 %v637, %v636
      %v653 = vpack.c.b16 %v639, %v638
      %v654 = vpack.c.b16 %v641, %v640
      %v655 = vpack.c.b16 %v643, %v642
      %v656 = vpack.c.b16 %v645, %v644
      %v657 = vpack.c.b16 %v647, %v646
      %v658 = vpack.c.b16 %v649, %v648
      %v659 = vpack.c.b16 %v651, %v650
      %668 = vmatprep.subr.bf16.mxu0 0
      %669 = vmatpush1.bf16.msra.mxu0 %v652
      %670 = vmatprep.subr.bf16.mxu0 0
      %671 = vmatpush1.bf16.msra.mxu0 %v653
      %672 = vmatprep.subr.bf16.mxu0 0
      %673 = vmatpush1.bf16.msra.mxu0 %v654
      %674 = vmatprep.subr.bf16.mxu0 0
      %675 = vmatpush1.bf16.msra.mxu0 %v655
      %676 = vmatprep.subr.bf16.mxu0 0
      %677 = vmatpush1.bf16.msra.mxu0 %v656
      %678 = vmatprep.subr.bf16.mxu0 0
      %679 = vmatpush1.bf16.msra.mxu0 %v657
      %680 = vmatprep.subr.bf16.mxu0 0
      %681 = vmatpush1.bf16.msra.mxu0 %v658
      %682 = vmatprep.subr.bf16.mxu0 0
      %683 = vmatpush1.bf16.msra.mxu0 %v659
      %684 = vmatprep.subr.bf16.mxu0 0
      %685 = vmatpush1.bf16.msra.mxu0 0
      %686 = vmatprep.subr.bf16.mxu0 0
      %687 = vmatpush1.bf16.msra.mxu0 0
      %688 = vmatprep.subr.bf16.mxu0 0
      %689 = vmatpush1.bf16.msra.mxu0 0
      %690 = vmatprep.subr.bf16.mxu0 0
      %691 = vmatpush1.bf16.msra.mxu0 0
      %692 = vmatprep.subr.bf16.mxu0 0
      %693 = vmatpush1.bf16.msra.mxu0 0
      %694 = vmatprep.subr.bf16.mxu0 0
      %695 = vmatpush1.bf16.msra.mxu0 0
      %696 = vmatprep.subr.bf16.mxu0 0
      %697 = vmatpush1.bf16.msra.mxu0 0
      %698 = vmatprep.subr.bf16.mxu0 0
      %699 = vmatpush1.bf16.msra.mxu0 0
      %700 = vmatprep.mubr.bf16.mxu0 0
      %701 = vmatmul.mubr.bf16.gmra.mrb[0].mxu0 %v584
      %v702 = vpop.f32.mrb[0].mxu0
      %v703 = vadd.f32 %v619, %v702
      %v704 = vpop.f32.mrb[0].mxu0
      %v705 = vpop.f32.mrb[0].mxu0
      %v706 = vadd.f32 %v619, %v705
      %v707 = vpop.f32.mrb[0].mxu0
      %708 = vmatprep.mubr.bf16.mxu0 0
      %709 = vmatmul.mubr.bf16.gmra.mrb[0].mxu0 %v585
      %v710 = vpop.f32.mrb[0].mxu0
      %v711 = vadd.f32 %v619, %v710
      %v712 = vpop.f32.mrb[0].mxu0
      %v713 = vpop.f32.mrb[0].mxu0
      %v714 = vadd.f32 %v619, %v713
      %v715 = vpop.f32.mrb[0].mxu0
      %716 = vmatprep.mubr.bf16.mxu0 0
      %717 = vmatmul.mubr.bf16.gmra.mrb[0].mxu0 %v586
      %v718 = vpop.f32.mrb[0].mxu0
      %v719 = vadd.f32 %v619, %v718
      %v720 = vpop.f32.mrb[0].mxu0
      %v721 = vpop.f32.mrb[0].mxu0
      %v722 = vadd.f32 %v619, %v721
      %v723 = vpop.f32.mrb[0].mxu0
      %724 = vmatprep.mubr.bf16.mxu0 0
      %725 = vmatmul.mubr.bf16.gmra.mrb[0].mxu0 %v587
      %v726 = vpop.f32.mrb[0].mxu0
      %v727 = vadd.f32 %v619, %v726
      %v728 = vpop.f32.mrb[0].mxu0
      %v729 = vpop.f32.mrb[0].mxu0
      %v730 = vadd.f32 %v619, %v729
      %v731 = vpop.f32.mrb[0].mxu0
      %732 = vmatprep.mubr.bf16.mxu0 0
      %733 = vmatmul.mubr.bf16.gmra.mrb[0].mxu0 %v588
      %v734 = vpop.f32.mrb[0].mxu0
      %v735 = vadd.f32 %v619, %v734
      %v736 = vpop.f32.mrb[0].mxu0
      %v737 = vpop.f32.mrb[0].mxu0
      %v738 = vadd.f32 %v619, %v737
      %v739 = vpop.f32.mrb[0].mxu0
      %740 = vmatprep.mubr.bf16.mxu0 0
      %741 = vmatmul.mubr.bf16.gmra.mrb[0].mxu0 %v589
      %v742 = vpop.f32.mrb[0].mxu0
      %v743 = vadd.f32 %v619, %v742
      %v744 = vpop.f32.mrb[0].mxu0
      %v745 = vpop.f32.mrb[0].mxu0
      %v746 = vadd.f32 %v619, %v745
      %v747 = vpop.f32.mrb[0].mxu0
      %748 = vmatprep.mubr.bf16.mxu0 0
      %749 = vmatmul.mubr.bf16.gmra.mrb[0].mxu0 %v590
      %v750 = vpop.f32.mrb[0].mxu0
      %v751 = vadd.f32 %v619, %v750
      %v752 = vpop.f32.mrb[0].mxu0
      %v753 = vpop.f32.mrb[0].mxu0
      %v754 = vadd.f32 %v619, %v753
      %v755 = vpop.f32.mrb[0].mxu0
      %756 = vmatprep.mubr.bf16.mxu0 0
      %757 = vmatmul.mubr.bf16.gmra.mrb[0].mxu0 %v591
      %v758 = vpop.f32.mrb[0].mxu0
      %v759 = vadd.f32 %v619, %v758
      %v760 = vpop.f32.mrb[0].mxu0
      %v761 = vpop.f32.mrb[0].mxu0
      %v762 = vadd.f32 %v619, %v761
      %v763 = vpop.f32.mrb[0].mxu0
      %764 = vmatprep.mubr.bf16.mxu0 0
      %765 = vmatmul.mubr.bf16.gmra.mrb[0].mxu0 %v592
      %v766 = vpop.f32.mrb[0].mxu0
      %v767 = vadd.f32 %v619, %v766
      %v768 = vpop.f32.mrb[0].mxu0
      %v769 = vpop.f32.mrb[0].mxu0
      %v770 = vadd.f32 %v619, %v769
      %v771 = vpop.f32.mrb[0].mxu0
      %772 = vmatprep.mubr.bf16.mxu0 0
      %773 = vmatmul.mubr.bf16.gmra.mrb[0].mxu0 %v593
      %v774 = vpop.f32.mrb[0].mxu0
      %v775 = vadd.f32 %v619, %v774
      %v776 = vpop.f32.mrb[0].mxu0
      %v777 = vpop.f32.mrb[0].mxu0
      %v778 = vadd.f32 %v619, %v777
      %v779 = vpop.f32.mrb[0].mxu0
      %780 = vmatprep.mubr.bf16.mxu0 0
      %781 = vmatmul.mubr.bf16.gmra.mrb[0].mxu0 %v594
      %v782 = vpop.f32.mrb[0].mxu0
      %v783 = vadd.f32 %v619, %v782
      %v784 = vpop.f32.mrb[0].mxu0
      %v785 = vpop.f32.mrb[0].mxu0
      %v786 = vadd.f32 %v619, %v785
      %v787 = vpop.f32.mrb[0].mxu0
      %788 = vmatprep.mubr.bf16.mxu0 0
      %789 = vmatmul.mubr.bf16.gmra.mrb[0].mxu0 %v595
      %v790 = vpop.f32.mrb[0].mxu0
      %v791 = vadd.f32 %v619, %v790
      %v792 = vpop.f32.mrb[0].mxu0
      %v793 = vpop.f32.mrb[0].mxu0
      %v794 = vadd.f32 %v619, %v793
      %v795 = vpop.f32.mrb[0].mxu0
      %796 = vmatprep.mubr.bf16.mxu0 0
      %797 = vmatmul.mubr.bf16.gmra.mrb[0].mxu0 %v596
      %v798 = vpop.f32.mrb[0].mxu0
      %v799 = vadd.f32 %v619, %v798
      %v800 = vpop.f32.mrb[0].mxu0
      %v801 = vpop.f32.mrb[0].mxu0
      %v802 = vadd.f32 %v619, %v801
      %v803 = vpop.f32.mrb[0].mxu0
      %804 = vmatprep.mubr.bf16.mxu0 0
      %805 = vmatmul.mubr.bf16.gmra.mrb[0].mxu0 %v597
      %v806 = vpop.f32.mrb[0].mxu0
      %v807 = vadd.f32 %v619, %v806
      %v808 = vpop.f32.mrb[0].mxu0
      %v809 = vpop.f32.mrb[0].mxu0
      %v810 = vadd.f32 %v619, %v809
      %v811 = vpop.f32.mrb[0].mxu0
      %812 = vmatprep.mubr.bf16.mxu0 0
      %813 = vmatmul.mubr.bf16.gmra.mrb[0].mxu0 %v598
      %v814 = vpop.f32.mrb[0].mxu0
      %v815 = vadd.f32 %v619, %v814
      %v816 = vpop.f32.mrb[0].mxu0
      %v817 = vpop.f32.mrb[0].mxu0
      %v818 = vadd.f32 %v619, %v817
      %v819 = vpop.f32.mrb[0].mxu0
      %820 = vmatprep.mubr.bf16.mxu0 0
      %821 = vmatmul.mubr.bf16.gmra.mrb[0].mxu0 %v599
      %v822 = vpop.f32.mrb[0].mxu0
      %v823 = vadd.f32 %v619, %v822
      %v824 = vpop.f32.mrb[0].mxu0
      %v825 = vpop.f32.mrb[0].mxu0
      %v826 = vadd.f32 %v619, %v825
      %v827 = vpop.f32.mrb[0].mxu0
      %828 = vdwg.mxu0
      %v829 = vmax.f32 %v703, 0.0
      %v830 = vmax.f32 %v706, 0.0
      %v831 = vmax.f32 %v711, 0.0
      %v832 = vmax.f32 %v714, 0.0
      %v833 = vmax.f32 %v719, 0.0
      %v834 = vmax.f32 %v722, 0.0
      %v835 = vmax.f32 %v727, 0.0
      %v836 = vmax.f32 %v730, 0.0
      %v837 = vmax.f32 %v735, 0.0
      %v838 = vmax.f32 %v738, 0.0
      %v839 = vmax.f32 %v743, 0.0
      %v840 = vmax.f32 %v746, 0.0
      %v841 = vmax.f32 %v751, 0.0
      %v842 = vmax.f32 %v754, 0.0
      %v843 = vmax.f32 %v759, 0.0
      %v844 = vmax.f32 %v762, 0.0
      %v845 = vmax.f32 %v767, 0.0
      %v846 = vmax.f32 %v770, 0.0
      %v847 = vmax.f32 %v775, 0.0
      %v848 = vmax.f32 %v778, 0.0
      %v849 = vmax.f32 %v783, 0.0
      %v850 = vmax.f32 %v786, 0.0
      %v851 = vmax.f32 %v791, 0.0
      %v852 = vmax.f32 %v794, 0.0
      %v853 = vmax.f32 %v799, 0.0
      %v854 = vmax.f32 %v802, 0.0
      %v855 = vmax.f32 %v807, 0.0
      %v856 = vmax.f32 %v810, 0.0
      %v857 = vmax.f32 %v815, 0.0
      %v858 = vmax.f32 %v818, 0.0
      %v859 = vmax.f32 %v823, 0.0
      %v860 = vmax.f32 %v826, 0.0
      %v861 = vpack.c.bf16 %v830, %v829
      %v862 = vpack.c.bf16 %v832, %v831
      %v863 = vpack.c.bf16 %v834, %v833
      %v864 = vpack.c.bf16 %v836, %v835
      %v865 = vpack.c.bf16 %v838, %v837
      %v866 = vpack.c.bf16 %v840, %v839
      %v867 = vpack.c.bf16 %v842, %v841
      %v868 = vpack.c.bf16 %v844, %v843
      %v869 = vpack.c.bf16 %v846, %v845
      %v870 = vpack.c.bf16 %v848, %v847
      %v871 = vpack.c.bf16 %v850, %v849
      %v872 = vpack.c.bf16 %v852, %v851
      %v873 = vpack.c.bf16 %v854, %v853
      %v874 = vpack.c.bf16 %v856, %v855
      %v875 = vpack.c.bf16 %v858, %v857
      %v876 = vpack.c.bf16 %v860, %v859
      %s877 = scalar_lea.vmem %s2, 64
      %v878 = vld [vmem:[%s877] sm:$0xf]
      %v879 = vld [vmem:[%s877 + $0x4] sm:$0xf]
      %v880 = vld [vmem:[%s877 + $0x8] sm:$0xf]
      %v881 = vld [vmem:[%s877 + $0xc] sm:$0xf]
      %v882 = vld [vmem:[%s877 + $0x10] sm:$0xf]
      %v883 = vld [vmem:[%s877 + $0x14] sm:$0xf]
      %v884 = vld [vmem:[%s877 + $0x18] sm:$0xf]
      %v885 = vld [vmem:[%s877 + $0x1c] sm:$0xf]
      %v886 = vld [vmem:[%s877 + $0x20] sm:$0xf]
      %v887 = vld [vmem:[%s877 + $0x24] sm:$0xf]
      %v888 = vld [vmem:[%s877 + $0x28] sm:$0xf]
      %v889 = vld [vmem:[%s877 + $0x2c] sm:$0xf]
      %v890 = vld [vmem:[%s877 + $0x30] sm:$0xf]
      %v891 = vld [vmem:[%s877 + $0x34] sm:$0xf]
      %v892 = vld [vmem:[%s877 + $0x38] sm:$0xf]
      %v893 = vld [vmem:[%s877 + $0x3c] sm:$0xf]
      %v894 = vlaneseq
      %v895 = vshrl.u32 %v894, 7
      %v896 = vsub.s32 0, %v895
      %v897 = vrot.slane %v238, %v896
      %v914 = vunpack.c.l.b16 %v878
      %v915 = vunpack.c.l.b16 %v879
      %v916 = vunpack.c.l.b16 %v880
      %v917 = vunpack.c.l.b16 %v881
      %v918 = vunpack.c.l.b16 %v882
      %v919 = vunpack.c.l.b16 %v883
      %v920 = vunpack.c.l.b16 %v884
      %v921 = vunpack.c.l.b16 %v885
      %v922 = vunpack.c.l.b16 %v886
      %v923 = vunpack.c.l.b16 %v887
      %v924 = vunpack.c.l.b16 %v888
      %v925 = vunpack.c.l.b16 %v889
      %v926 = vunpack.c.l.b16 %v890
      %v927 = vunpack.c.l.b16 %v891
      %v928 = vunpack.c.l.b16 %v892
      %v929 = vunpack.c.l.b16 %v893
      %v930 = vpack.c.b16 %v915, %v914
      %v931 = vpack.c.b16 %v917, %v916
      %v932 = vpack.c.b16 %v919, %v918
      %v933 = vpack.c.b16 %v921, %v920
      %v934 = vpack.c.b16 %v923, %v922
      %v935 = vpack.c.b16 %v925, %v924
      %v936 = vpack.c.b16 %v927, %v926
      %v937 = vpack.c.b16 %v929, %v928
      %946 = vmatprep.subr.bf16.mxu0 0
      %947 = vmatpush1.bf16.msra.mxu0 %v930
      %948 = vmatprep.subr.bf16.mxu0 0
      %949 = vmatpush1.bf16.msra.mxu0 %v931
      %950 = vmatprep.subr.bf16.mxu0 0
      %951 = vmatpush1.bf16.msra.mxu0 %v932
      %952 = vmatprep.subr.bf16.mxu0 0
      %953 = vmatpush1.bf16.msra.mxu0 %v933
      %954 = vmatprep.subr.bf16.mxu0 0
      %955 = vmatpush1.bf16.msra.mxu0 %v934
      %956 = vmatprep.subr.bf16.mxu0 0
      %957 = vmatpush1.bf16.msra.mxu0 %v935
      %958 = vmatprep.subr.bf16.mxu0 0
      %959 = vmatpush1.bf16.msra.mxu0 %v936
      %960 = vmatprep.subr.bf16.mxu0 0
      %961 = vmatpush1.bf16.msra.mxu0 %v937
      %962 = vmatprep.subr.bf16.mxu0 0
      %963 = vmatpush1.bf16.msra.mxu0 0
      %964 = vmatprep.subr.bf16.mxu0 0
      %965 = vmatpush1.bf16.msra.mxu0 0
      %966 = vmatprep.subr.bf16.mxu0 0
      %967 = vmatpush1.bf16.msra.mxu0 0
      %968 = vmatprep.subr.bf16.mxu0 0
      %969 = vmatpush1.bf16.msra.mxu0 0
      %970 = vmatprep.subr.bf16.mxu0 0
      %971 = vmatpush1.bf16.msra.mxu0 0
      %972 = vmatprep.subr.bf16.mxu0 0
      %973 = vmatpush1.bf16.msra.mxu0 0
      %974 = vmatprep.subr.bf16.mxu0 0
      %975 = vmatpush1.bf16.msra.mxu0 0
      %976 = vmatprep.subr.bf16.mxu0 0
      %977 = vmatpush1.bf16.msra.mxu0 0
      %978 = vmatprep.mubr.bf16.mxu0 0
      %979 = vmatmul.mubr.bf16.gmra.mrb[0].mxu0 %v861
      %v980 = vpop.f32.mrb[0].mxu0
      %v981 = vadd.f32 %v897, %v980
      %v982 = vpop.f32.mrb[0].mxu0
      %v983 = vpop.f32.mrb[0].mxu0
      %v984 = vadd.f32 %v897, %v983
      %v985 = vpop.f32.mrb[0].mxu0
      %986 = vmatprep.mubr.bf16.mxu0 0
      %987 = vmatmul.mubr.bf16.gmra.mrb[0].mxu0 %v862
      %v988 = vpop.f32.mrb[0].mxu0
      %v989 = vadd.f32 %v897, %v988
      %v990 = vpop.f32.mrb[0].mxu0
      %v991 = vpop.f32.mrb[0].mxu0
      %v992 = vadd.f32 %v897, %v991
      %v993 = vpop.f32.mrb[0].mxu0
      %994 = vmatprep.mubr.bf16.mxu0 0
      %995 = vmatmul.mubr.bf16.gmra.mrb[0].mxu0 %v863
      %v996 = vpop.f32.mrb[0].mxu0
      %v997 = vadd.f32 %v897, %v996
      %v998 = vpop.f32.mrb[0].mxu0
      %v999 = vpop.f32.mrb[0].mxu0
      %v1000 = vadd.f32 %v897, %v999
      %v1001 = vpop.f32.mrb[0].mxu0
      %1002 = vmatprep.mubr.bf16.mxu0 0
      %1003 = vmatmul.mubr.bf16.gmra.mrb[0].mxu0 %v864
      %v1004 = vpop.f32.mrb[0].mxu0
      %v1005 = vadd.f32 %v897, %v1004
      %v1006 = vpop.f32.mrb[0].mxu0
      %v1007 = vpop.f32.mrb[0].mxu0
      %v1008 = vadd.f32 %v897, %v1007
      %v1009 = vpop.f32.mrb[0].mxu0
      %1010 = vmatprep.mubr.bf16.mxu0 0
      %1011 = vmatmul.mubr.bf16.gmra.mrb[0].mxu0 %v865
      %v1012 = vpop.f32.mrb[0].mxu0
      %v1013 = vadd.f32 %v897, %v1012
      %v1014 = vpop.f32.mrb[0].mxu0
      %v1015 = vpop.f32.mrb[0].mxu0
      %v1016 = vadd.f32 %v897, %v1015
      %v1017 = vpop.f32.mrb[0].mxu0
      %1018 = vmatprep.mubr.bf16.mxu0 0
      %1019 = vmatmul.mubr.bf16.gmra.mrb[0].mxu0 %v866
      %v1020 = vpop.f32.mrb[0].mxu0
      %v1021 = vadd.f32 %v897, %v1020
      %v1022 = vpop.f32.mrb[0].mxu0
      %v1023 = vpop.f32.mrb[0].mxu0
      %v1024 = vadd.f32 %v897, %v1023
      %v1025 = vpop.f32.mrb[0].mxu0
      %1026 = vmatprep.mubr.bf16.mxu0 0
      %1027 = vmatmul.mubr.bf16.gmra.mrb[0].mxu0 %v867
      %v1028 = vpop.f32.mrb[0].mxu0
      %v1029 = vadd.f32 %v897, %v1028
      %v1030 = vpop.f32.mrb[0].mxu0
      %v1031 = vpop.f32.mrb[0].mxu0
      %v1032 = vadd.f32 %v897, %v1031
      %v1033 = vpop.f32.mrb[0].mxu0
      %1034 = vmatprep.mubr.bf16.mxu0 0
      %1035 = vmatmul.mubr.bf16.gmra.mrb[0].mxu0 %v868
      %v1036 = vpop.f32.mrb[0].mxu0
      %v1037 = vadd.f32 %v897, %v1036
      %v1038 = vpop.f32.mrb[0].mxu0
      %v1039 = vpop.f32.mrb[0].mxu0
      %v1040 = vadd.f32 %v897, %v1039
      %v1041 = vpop.f32.mrb[0].mxu0
      %1042 = vmatprep.mubr.bf16.mxu0 0
      %1043 = vmatmul.mubr.bf16.gmra.mrb[0].mxu0 %v869
      %v1044 = vpop.f32.mrb[0].mxu0
      %v1045 = vadd.f32 %v897, %v1044
      %v1046 = vpop.f32.mrb[0].mxu0
      %v1047 = vpop.f32.mrb[0].mxu0
      %v1048 = vadd.f32 %v897, %v1047
      %v1049 = vpop.f32.mrb[0].mxu0
      %1050 = vmatprep.mubr.bf16.mxu0 0
      %1051 = vmatmul.mubr.bf16.gmra.mrb[0].mxu0 %v870
      %v1052 = vpop.f32.mrb[0].mxu0
      %v1053 = vadd.f32 %v897, %v1052
      %v1054 = vpop.f32.mrb[0].mxu0
      %v1055 = vpop.f32.mrb[0].mxu0
      %v1056 = vadd.f32 %v897, %v1055
      %v1057 = vpop.f32.mrb[0].mxu0
      %1058 = vmatprep.mubr.bf16.mxu0 0
      %1059 = vmatmul.mubr.bf16.gmra.mrb[0].mxu0 %v871
      %v1060 = vpop.f32.mrb[0].mxu0
      %v1061 = vadd.f32 %v897, %v1060
      %v1062 = vpop.f32.mrb[0].mxu0
      %v1063 = vpop.f32.mrb[0].mxu0
      %v1064 = vadd.f32 %v897, %v1063
      %v1065 = vpop.f32.mrb[0].mxu0
      %1066 = vmatprep.mubr.bf16.mxu0 0
      %1067 = vmatmul.mubr.bf16.gmra.mrb[0].mxu0 %v872
      %v1068 = vpop.f32.mrb[0].mxu0
      %v1069 = vadd.f32 %v897, %v1068
      %v1070 = vpop.f32.mrb[0].mxu0
      %v1071 = vpop.f32.mrb[0].mxu0
      %v1072 = vadd.f32 %v897, %v1071
      %v1073 = vpop.f32.mrb[0].mxu0
      %1074 = vmatprep.mubr.bf16.mxu0 0
      %1075 = vmatmul.mubr.bf16.gmra.mrb[0].mxu0 %v873
      %v1076 = vpop.f32.mrb[0].mxu0
      %v1077 = vadd.f32 %v897, %v1076
      %v1078 = vpop.f32.mrb[0].mxu0
      %v1079 = vpop.f32.mrb[0].mxu0
      %v1080 = vadd.f32 %v897, %v1079
      %v1081 = vpop.f32.mrb[0].mxu0
      %1082 = vmatprep.mubr.bf16.mxu0 0
      %1083 = vmatmul.mubr.bf16.gmra.mrb[0].mxu0 %v874
      %v1084 = vpop.f32.mrb[0].mxu0
      %v1085 = vadd.f32 %v897, %v1084
      %v1086 = vpop.f32.mrb[0].mxu0
      %v1087 = vpop.f32.mrb[0].mxu0
      %v1088 = vadd.f32 %v897, %v1087
      %v1089 = vpop.f32.mrb[0].mxu0
      %1090 = vmatprep.mubr.bf16.mxu0 0
      %1091 = vmatmul.mubr.bf16.gmra.mrb[0].mxu0 %v875
      %v1092 = vpop.f32.mrb[0].mxu0
      %v1093 = vadd.f32 %v897, %v1092
      %v1094 = vpop.f32.mrb[0].mxu0
      %v1095 = vpop.f32.mrb[0].mxu0
      %v1096 = vadd.f32 %v897, %v1095
      %v1097 = vpop.f32.mrb[0].mxu0
      %1098 = vmatprep.mubr.bf16.mxu0 0
      %1099 = vmatmul.mubr.bf16.gmra.mrb[0].mxu0 %v876
      %v1100 = vpop.f32.mrb[0].mxu0
      %v1101 = vadd.f32 %v897, %v1100
      %v1102 = vpop.f32.mrb[0].mxu0
      %v1103 = vpop.f32.mrb[0].mxu0
      %v1104 = vadd.f32 %v897, %v1103
      %v1105 = vpop.f32.mrb[0].mxu0
      %1106 = vdwg.mxu0
      %v1107 = vmax.f32 %v981, 0.0
      %v1108 = vmax.f32 %v984, 0.0
      %v1109 = vmax.f32 %v989, 0.0
      %v1110 = vmax.f32 %v992, 0.0
      %v1111 = vmax.f32 %v997, 0.0
      %v1112 = vmax.f32 %v1000, 0.0
      %v1113 = vmax.f32 %v1005, 0.0
      %v1114 = vmax.f32 %v1008, 0.0
      %v1115 = vmax.f32 %v1013, 0.0
      %v1116 = vmax.f32 %v1016, 0.0
      %v1117 = vmax.f32 %v1021, 0.0
      %v1118 = vmax.f32 %v1024, 0.0
      %v1119 = vmax.f32 %v1029, 0.0
      %v1120 = vmax.f32 %v1032, 0.0
      %v1121 = vmax.f32 %v1037, 0.0
      %v1122 = vmax.f32 %v1040, 0.0
      %v1123 = vmax.f32 %v1045, 0.0
      %v1124 = vmax.f32 %v1048, 0.0
      %v1125 = vmax.f32 %v1053, 0.0
      %v1126 = vmax.f32 %v1056, 0.0
      %v1127 = vmax.f32 %v1061, 0.0
      %v1128 = vmax.f32 %v1064, 0.0
      %v1129 = vmax.f32 %v1069, 0.0
      %v1130 = vmax.f32 %v1072, 0.0
      %v1131 = vmax.f32 %v1077, 0.0
      %v1132 = vmax.f32 %v1080, 0.0
      %v1133 = vmax.f32 %v1085, 0.0
      %v1134 = vmax.f32 %v1088, 0.0
      %v1135 = vmax.f32 %v1093, 0.0
      %v1136 = vmax.f32 %v1096, 0.0
      %v1137 = vmax.f32 %v1101, 0.0
      %v1138 = vmax.f32 %v1104, 0.0
      %1139 = vadd.xlane.f32.xlu0 %v1107
      %v1140 = vpop.xlane.xlu0 %1139
      %1141 = vadd.xlane.f32.xlu0 %v1108
      %v1142 = vpop.xlane.xlu0 %1141
      %1143 = vadd.xlane.f32.xlu0 %v1109
      %v1144 = vpop.xlane.xlu0 %1143
      %1145 = vadd.xlane.f32.xlu0 %v1110
      %v1146 = vpop.xlane.xlu0 %1145
      %1147 = vadd.xlane.f32.xlu0 %v1111
      %v1148 = vpop.xlane.xlu0 %1147
      %1149 = vadd.xlane.f32.xlu0 %v1112
      %v1150 = vpop.xlane.xlu0 %1149
      %1151 = vadd.xlane.f32.xlu0 %v1113
      %v1152 = vpop.xlane.xlu0 %1151
      %1153 = vadd.xlane.f32.xlu0 %v1114
      %v1154 = vpop.xlane.xlu0 %1153
      %1155 = vadd.xlane.f32.xlu0 %v1115
      %v1156 = vpop.xlane.xlu0 %1155
      %1157 = vadd.xlane.f32.xlu0 %v1116
      %v1158 = vpop.xlane.xlu0 %1157
      %1159 = vadd.xlane.f32.xlu0 %v1117
      %v1160 = vpop.xlane.xlu0 %1159
      %1161 = vadd.xlane.f32.xlu0 %v1118
      %v1162 = vpop.xlane.xlu0 %1161
      %1163 = vadd.xlane.f32.xlu0 %v1119
      %v1164 = vpop.xlane.xlu0 %1163
      %1165 = vadd.xlane.f32.xlu0 %v1120
      %v1166 = vpop.xlane.xlu0 %1165
      %1167 = vadd.xlane.f32.xlu0 %v1121
      %v1168 = vpop.xlane.xlu0 %1167
      %1169 = vadd.xlane.f32.xlu0 %v1122
      %v1170 = vpop.xlane.xlu0 %1169
      %1171 = vadd.xlane.f32.xlu0 %v1123
      %v1172 = vpop.xlane.xlu0 %1171
      %1173 = vadd.xlane.f32.xlu0 %v1124
      %v1174 = vpop.xlane.xlu0 %1173
      %1175 = vadd.xlane.f32.xlu0 %v1125
      %v1176 = vpop.xlane.xlu0 %1175
      %1177 = vadd.xlane.f32.xlu0 %v1126
      %v1178 = vpop.xlane.xlu0 %1177
      %1179 = vadd.xlane.f32.xlu0 %v1127
      %v1180 = vpop.xlane.xlu0 %1179
      %1181 = vadd.xlane.f32.xlu0 %v1128
      %v1182 = vpop.xlane.xlu0 %1181
      %1183 = vadd.xlane.f32.xlu0 %v1129
      %v1184 = vpop.xlane.xlu0 %1183
      %1185 = vadd.xlane.f32.xlu0 %v1130
      %v1186 = vpop.xlane.xlu0 %1185
      %1187 = vadd.xlane.f32.xlu0 %v1131
      %v1188 = vpop.xlane.xlu0 %1187
      %1189 = vadd.xlane.f32.xlu0 %v1132
      %v1190 = vpop.xlane.xlu0 %1189
      %1191 = vadd.xlane.f32.xlu0 %v1133
      %v1192 = vpop.xlane.xlu0 %1191
      %1193 = vadd.xlane.f32.xlu0 %v1134
      %v1194 = vpop.xlane.xlu0 %1193
      %1195 = vadd.xlane.f32.xlu0 %v1135
      %v1196 = vpop.xlane.xlu0 %1195
      %1197 = vadd.xlane.f32.xlu0 %v1136
      %v1198 = vpop.xlane.xlu0 %1197
      %1199 = vadd.xlane.f32.xlu0 %v1137
      %v1200 = vpop.xlane.xlu0 %1199
      %1201 = vadd.xlane.f32.xlu0 %v1138
      %v1202 = vpop.xlane.xlu0 %1201
      %v1203 = vmul.f32 %v1140, 0.0625
      %v1204 = vmul.f32 %v1142, 0.0625
      %v1205 = vmul.f32 %v1144, 0.0625
      %v1206 = vmul.f32 %v1146, 0.0625
      %v1207 = vmul.f32 %v1148, 0.0625
      %v1208 = vmul.f32 %v1150, 0.0625
      %v1209 = vmul.f32 %v1152, 0.0625
      %v1210 = vmul.f32 %v1154, 0.0625
      %v1211 = vmul.f32 %v1156, 0.0625
      %v1212 = vmul.f32 %v1158, 0.0625
      %v1213 = vmul.f32 %v1160, 0.0625
      %v1214 = vmul.f32 %v1162, 0.0625
      %v1215 = vmul.f32 %v1164, 0.0625
      %v1216 = vmul.f32 %v1166, 0.0625
      %v1217 = vmul.f32 %v1168, 0.0625
      %v1218 = vmul.f32 %v1170, 0.0625
      %v1219 = vmul.f32 %v1172, 0.0625
      %v1220 = vmul.f32 %v1174, 0.0625
      %v1221 = vmul.f32 %v1176, 0.0625
      %v1222 = vmul.f32 %v1178, 0.0625
      %v1223 = vmul.f32 %v1180, 0.0625
      %v1224 = vmul.f32 %v1182, 0.0625
      %v1225 = vmul.f32 %v1184, 0.0625
      %v1226 = vmul.f32 %v1186, 0.0625
      %v1227 = vmul.f32 %v1188, 0.0625
      %v1228 = vmul.f32 %v1190, 0.0625
      %v1229 = vmul.f32 %v1192, 0.0625
      %v1230 = vmul.f32 %v1194, 0.0625
      %v1231 = vmul.f32 %v1196, 0.0625
      %v1232 = vmul.f32 %v1198, 0.0625
      %v1233 = vmul.f32 %v1200, 0.0625
      %v1234 = vmul.f32 %v1202, 0.0625
      %v1235 = vsub.f32 %v1107, %v1203
      %v1236 = vsub.f32 %v1108, %v1204
      %v1237 = vsub.f32 %v1109, %v1205
      %v1238 = vsub.f32 %v1110, %v1206
      %v1239 = vsub.f32 %v1111, %v1207
      %v1240 = vsub.f32 %v1112, %v1208
      %v1241 = vsub.f32 %v1113, %v1209
      %v1242 = vsub.f32 %v1114, %v1210
      %v1243 = vsub.f32 %v1115, %v1211
      %v1244 = vsub.f32 %v1116, %v1212
      %v1245 = vsub.f32 %v1117, %v1213
      %v1246 = vsub.f32 %v1118, %v1214
      %v1247 = vsub.f32 %v1119, %v1215
      %v1248 = vsub.f32 %v1120, %v1216
      %v1249 = vsub.f32 %v1121, %v1217
      %v1250 = vsub.f32 %v1122, %v1218
      %v1251 = vsub.f32 %v1123, %v1219
      %v1252 = vsub.f32 %v1124, %v1220
      %v1253 = vsub.f32 %v1125, %v1221
      %v1254 = vsub.f32 %v1126, %v1222
      %v1255 = vsub.f32 %v1127, %v1223
      %v1256 = vsub.f32 %v1128, %v1224
      %v1257 = vsub.f32 %v1129, %v1225
      %v1258 = vsub.f32 %v1130, %v1226
      %v1259 = vsub.f32 %v1131, %v1227
      %v1260 = vsub.f32 %v1132, %v1228
      %v1261 = vsub.f32 %v1133, %v1229
      %v1262 = vsub.f32 %v1134, %v1230
      %v1263 = vsub.f32 %v1135, %v1231
      %v1264 = vsub.f32 %v1136, %v1232
      %v1265 = vsub.f32 %v1137, %v1233
      %v1266 = vsub.f32 %v1138, %v1234
      %v1267 = vlaneseq
      %v1268 = vand.u32 %v1267, 127
      %vm1269 = vcmp.lt.s32.totalorder %v1268, 16
      %v1270 = vsel %vm1269, %v1235, 0.0
      %v1271 = vsel %vm1269, %v1236, 0.0
      %v1272 = vsel %vm1269, %v1237, 0.0
      %v1273 = vsel %vm1269, %v1238, 0.0
      %v1274 = vsel %vm1269, %v1239, 0.0
      %v1275 = vsel %vm1269, %v1240, 0.0
      %v1276 = vsel %vm1269, %v1241, 0.0
      %v1277 = vsel %vm1269, %v1242, 0.0
      %v1278 = vsel %vm1269, %v1243, 0.0
      %v1279 = vsel %vm1269, %v1244, 0.0
      %v1280 = vsel %vm1269, %v1245, 0.0
      %v1281 = vsel %vm1269, %v1246, 0.0
      %v1282 = vsel %vm1269, %v1247, 0.0
      %v1283 = vsel %vm1269, %v1248, 0.0
      %v1284 = vsel %vm1269, %v1249, 0.0
      %v1285 = vsel %vm1269, %v1250, 0.0
      %v1286 = vsel %vm1269, %v1251, 0.0
      %v1287 = vsel %vm1269, %v1252, 0.0
      %v1288 = vsel %vm1269, %v1253, 0.0
      %v1289 = vsel %vm1269, %v1254, 0.0
      %v1290 = vsel %vm1269, %v1255, 0.0
      %v1291 = vsel %vm1269, %v1256, 0.0
      %v1292 = vsel %vm1269, %v1257, 0.0
      %v1293 = vsel %vm1269, %v1258, 0.0
      %v1294 = vsel %vm1269, %v1259, 0.0
      %v1295 = vsel %vm1269, %v1260, 0.0
      %v1296 = vsel %vm1269, %v1261, 0.0
      %v1297 = vsel %vm1269, %v1262, 0.0
      %v1298 = vsel %vm1269, %v1263, 0.0
      %v1299 = vsel %vm1269, %v1264, 0.0
      %v1300 = vsel %vm1269, %v1265, 0.0
      %v1301 = vsel %vm1269, %v1266, 0.0
      %v1302 = vmul.f32 %v1270, %v1270
      %v1303 = vmul.f32 %v1271, %v1271
      %v1304 = vmul.f32 %v1272, %v1272
      %v1305 = vmul.f32 %v1273, %v1273
      %v1306 = vmul.f32 %v1274, %v1274
      %v1307 = vmul.f32 %v1275, %v1275
      %v1308 = vmul.f32 %v1276, %v1276
      %v1309 = vmul.f32 %v1277, %v1277
      %v1310 = vmul.f32 %v1278, %v1278
      %v1311 = vmul.f32 %v1279, %v1279
      %v1312 = vmul.f32 %v1280, %v1280
      %v1313 = vmul.f32 %v1281, %v1281
      %v1314 = vmul.f32 %v1282, %v1282
      %v1315 = vmul.f32 %v1283, %v1283
      %v1316 = vmul.f32 %v1284, %v1284
      %v1317 = vmul.f32 %v1285, %v1285
      %v1318 = vmul.f32 %v1286, %v1286
      %v1319 = vmul.f32 %v1287, %v1287
      %v1320 = vmul.f32 %v1288, %v1288
      %v1321 = vmul.f32 %v1289, %v1289
      %v1322 = vmul.f32 %v1290, %v1290
      %v1323 = vmul.f32 %v1291, %v1291
      %v1324 = vmul.f32 %v1292, %v1292
      %v1325 = vmul.f32 %v1293, %v1293
      %v1326 = vmul.f32 %v1294, %v1294
      %v1327 = vmul.f32 %v1295, %v1295
      %v1328 = vmul.f32 %v1296, %v1296
      %v1329 = vmul.f32 %v1297, %v1297
      %v1330 = vmul.f32 %v1298, %v1298
      %v1331 = vmul.f32 %v1299, %v1299
      %v1332 = vmul.f32 %v1300, %v1300
      %v1333 = vmul.f32 %v1301, %v1301
      %1334 = vadd.xlane.f32.xlu0 %v1302
      %v1335 = vpop.xlane.xlu0 %1334
      %1336 = vadd.xlane.f32.xlu0 %v1303
      %v1337 = vpop.xlane.xlu0 %1336
      %1338 = vadd.xlane.f32.xlu0 %v1304
      %v1339 = vpop.xlane.xlu0 %1338
      %1340 = vadd.xlane.f32.xlu0 %v1305
      %v1341 = vpop.xlane.xlu0 %1340
      %1342 = vadd.xlane.f32.xlu0 %v1306
      %v1343 = vpop.xlane.xlu0 %1342
      %1344 = vadd.xlane.f32.xlu0 %v1307
      %v1345 = vpop.xlane.xlu0 %1344
      %1346 = vadd.xlane.f32.xlu0 %v1308
      %v1347 = vpop.xlane.xlu0 %1346
      %1348 = vadd.xlane.f32.xlu0 %v1309
      %v1349 = vpop.xlane.xlu0 %1348
      %1350 = vadd.xlane.f32.xlu0 %v1310
      %v1351 = vpop.xlane.xlu0 %1350
      %1352 = vadd.xlane.f32.xlu0 %v1311
      %v1353 = vpop.xlane.xlu0 %1352
      %1354 = vadd.xlane.f32.xlu0 %v1312
      %v1355 = vpop.xlane.xlu0 %1354
      %1356 = vadd.xlane.f32.xlu0 %v1313
      %v1357 = vpop.xlane.xlu0 %1356
      %1358 = vadd.xlane.f32.xlu0 %v1314
      %v1359 = vpop.xlane.xlu0 %1358
      %1360 = vadd.xlane.f32.xlu0 %v1315
      %v1361 = vpop.xlane.xlu0 %1360
      %1362 = vadd.xlane.f32.xlu0 %v1316
      %v1363 = vpop.xlane.xlu0 %1362
      %1364 = vadd.xlane.f32.xlu0 %v1317
      %v1365 = vpop.xlane.xlu0 %1364
      %1366 = vadd.xlane.f32.xlu0 %v1318
      %v1367 = vpop.xlane.xlu0 %1366
      %1368 = vadd.xlane.f32.xlu0 %v1319
      %v1369 = vpop.xlane.xlu0 %1368
      %1370 = vadd.xlane.f32.xlu0 %v1320
      %v1371 = vpop.xlane.xlu0 %1370
      %1372 = vadd.xlane.f32.xlu0 %v1321
      %v1373 = vpop.xlane.xlu0 %1372
      %1374 = vadd.xlane.f32.xlu0 %v1322
      %v1375 = vpop.xlane.xlu0 %1374
      %1376 = vadd.xlane.f32.xlu0 %v1323
      %v1377 = vpop.xlane.xlu0 %1376
      %1378 = vadd.xlane.f32.xlu0 %v1324
      %v1379 = vpop.xlane.xlu0 %1378
      %1380 = vadd.xlane.f32.xlu0 %v1325
      %v1381 = vpop.xlane.xlu0 %1380
      %1382 = vadd.xlane.f32.xlu0 %v1326
      %v1383 = vpop.xlane.xlu0 %1382
      %1384 = vadd.xlane.f32.xlu0 %v1327
      %v1385 = vpop.xlane.xlu0 %1384
      %1386 = vadd.xlane.f32.xlu0 %v1328
      %v1387 = vpop.xlane.xlu0 %1386
      %1388 = vadd.xlane.f32.xlu0 %v1329
      %v1389 = vpop.xlane.xlu0 %1388
      %1390 = vadd.xlane.f32.xlu0 %v1330
      %v1391 = vpop.xlane.xlu0 %1390
      %1392 = vadd.xlane.f32.xlu0 %v1331
      %v1393 = vpop.xlane.xlu0 %1392
      %1394 = vadd.xlane.f32.xlu0 %v1332
      %v1395 = vpop.xlane.xlu0 %1394
      %1396 = vadd.xlane.f32.xlu0 %v1333
      %v1397 = vpop.xlane.xlu0 %1396
      %v1398 = vmul.f32 %v1335, 0.0625
      %v1399 = vmul.f32 %v1337, 0.0625
      %v1400 = vmul.f32 %v1339, 0.0625
      %v1401 = vmul.f32 %v1341, 0.0625
      %v1402 = vmul.f32 %v1343, 0.0625
      %v1403 = vmul.f32 %v1345, 0.0625
      %v1404 = vmul.f32 %v1347, 0.0625
      %v1405 = vmul.f32 %v1349, 0.0625
      %v1406 = vmul.f32 %v1351, 0.0625
      %v1407 = vmul.f32 %v1353, 0.0625
      %v1408 = vmul.f32 %v1355, 0.0625
      %v1409 = vmul.f32 %v1357, 0.0625
      %v1410 = vmul.f32 %v1359, 0.0625
      %v1411 = vmul.f32 %v1361, 0.0625
      %v1412 = vmul.f32 %v1363, 0.0625
      %v1413 = vmul.f32 %v1365, 0.0625
      %v1414 = vmul.f32 %v1367, 0.0625
      %v1415 = vmul.f32 %v1369, 0.0625
      %v1416 = vmul.f32 %v1371, 0.0625
      %v1417 = vmul.f32 %v1373, 0.0625
      %v1418 = vmul.f32 %v1375, 0.0625
      %v1419 = vmul.f32 %v1377, 0.0625
      %v1420 = vmul.f32 %v1379, 0.0625
      %v1421 = vmul.f32 %v1381, 0.0625
      %v1422 = vmul.f32 %v1383, 0.0625
      %v1423 = vmul.f32 %v1385, 0.0625
      %v1424 = vmul.f32 %v1387, 0.0625
      %v1425 = vmul.f32 %v1389, 0.0625
      %v1426 = vmul.f32 %v1391, 0.0625
      %v1427 = vmul.f32 %v1393, 0.0625
      %v1428 = vmul.f32 %v1395, 0.0625
      %v1429 = vmul.f32 %v1397, 0.0625
      %v1430 = vadd.f32 %v1398, 1e-05
      %v1431 = vadd.f32 %v1399, 1e-05
      %v1432 = vadd.f32 %v1400, 1e-05
      %v1433 = vadd.f32 %v1401, 1e-05
      %v1434 = vadd.f32 %v1402, 1e-05
      %v1435 = vadd.f32 %v1403, 1e-05
      %v1436 = vadd.f32 %v1404, 1e-05
      %v1437 = vadd.f32 %v1405, 1e-05
      %v1438 = vadd.f32 %v1406, 1e-05
      %v1439 = vadd.f32 %v1407, 1e-05
      %v1440 = vadd.f32 %v1408, 1e-05
      %v1441 = vadd.f32 %v1409, 1e-05
      %v1442 = vadd.f32 %v1410, 1e-05
      %v1443 = vadd.f32 %v1411, 1e-05
      %v1444 = vadd.f32 %v1412, 1e-05
      %v1445 = vadd.f32 %v1413, 1e-05
      %v1446 = vadd.f32 %v1414, 1e-05
      %v1447 = vadd.f32 %v1415, 1e-05
      %v1448 = vadd.f32 %v1416, 1e-05
      %v1449 = vadd.f32 %v1417, 1e-05
      %v1450 = vadd.f32 %v1418, 1e-05
      %v1451 = vadd.f32 %v1419, 1e-05
      %v1452 = vadd.f32 %v1420, 1e-05
      %v1453 = vadd.f32 %v1421, 1e-05
      %v1454 = vadd.f32 %v1422, 1e-05
      %v1455 = vadd.f32 %v1423, 1e-05
      %v1456 = vadd.f32 %v1424, 1e-05
      %v1457 = vadd.f32 %v1425, 1e-05
      %v1458 = vadd.f32 %v1426, 1e-05
      %v1459 = vadd.f32 %v1427, 1e-05
      %v1460 = vadd.f32 %v1428, 1e-05
      %v1461 = vadd.f32 %v1429, 1e-05
      %v1462 = vrsqrt.pop %v1430
      %v1463 = vrsqrt.pop %v1431
      %v1464 = vrsqrt.pop %v1432
      %v1465 = vrsqrt.pop %v1433
      %v1466 = vrsqrt.pop %v1434
      %v1467 = vrsqrt.pop %v1435
      %v1468 = vrsqrt.pop %v1436
      %v1469 = vrsqrt.pop %v1437
      %v1470 = vrsqrt.pop %v1438
      %v1471 = vrsqrt.pop %v1439
      %v1472 = vrsqrt.pop %v1440
      %v1473 = vrsqrt.pop %v1441
      %v1474 = vrsqrt.pop %v1442
      %v1475 = vrsqrt.pop %v1443
      %v1476 = vrsqrt.pop %v1444
      %v1477 = vrsqrt.pop %v1445
      %v1478 = vrsqrt.pop %v1446
      %v1479 = vrsqrt.pop %v1447
      %v1480 = vrsqrt.pop %v1448
      %v1481 = vrsqrt.pop %v1449
      %v1482 = vrsqrt.pop %v1450
      %v1483 = vrsqrt.pop %v1451
      %v1484 = vrsqrt.pop %v1452
      %v1485 = vrsqrt.pop %v1453
      %v1486 = vrsqrt.pop %v1454
      %v1487 = vrsqrt.pop %v1455
      %v1488 = vrsqrt.pop %v1456
      %v1489 = vrsqrt.pop %v1457
      %v1490 = vrsqrt.pop %v1458
      %v1491 = vrsqrt.pop %v1459
      %v1492 = vrsqrt.pop %v1460
      %v1493 = vrsqrt.pop %v1461
      %v1494 = vmul.f32 %v1235, %v1462
      %v1495 = vmul.f32 %v1236, %v1463
      %v1496 = vmul.f32 %v1237, %v1464
      %v1497 = vmul.f32 %v1238, %v1465
      %v1498 = vmul.f32 %v1239, %v1466
      %v1499 = vmul.f32 %v1240, %v1467
      %v1500 = vmul.f32 %v1241, %v1468
      %v1501 = vmul.f32 %v1242, %v1469
      %v1502 = vmul.f32 %v1243, %v1470
      %v1503 = vmul.f32 %v1244, %v1471
      %v1504 = vmul.f32 %v1245, %v1472
      %v1505 = vmul.f32 %v1246, %v1473
      %v1506 = vmul.f32 %v1247, %v1474
      %v1507 = vmul.f32 %v1248, %v1475
      %v1508 = vmul.f32 %v1249, %v1476
      %v1509 = vmul.f32 %v1250, %v1477
      %v1510 = vmul.f32 %v1251, %v1478
      %v1511 = vmul.f32 %v1252, %v1479
      %v1512 = vmul.f32 %v1253, %v1480
      %v1513 = vmul.f32 %v1254, %v1481
      %v1514 = vmul.f32 %v1255, %v1482
      %v1515 = vmul.f32 %v1256, %v1483
      %v1516 = vmul.f32 %v1257, %v1484
      %v1517 = vmul.f32 %v1258, %v1485
      %v1518 = vmul.f32 %v1259, %v1486
      %v1519 = vmul.f32 %v1260, %v1487
      %v1520 = vmul.f32 %v1261, %v1488
      %v1521 = vmul.f32 %v1262, %v1489
      %v1522 = vmul.f32 %v1263, %v1490
      %v1523 = vmul.f32 %v1264, %v1491
      %v1524 = vmul.f32 %v1265, %v1492
      %v1525 = vmul.f32 %v1266, %v1493
      %v1526 = vlaneseq
      %v1527 = vshrl.u32 %v1526, 7
      %v1528 = vsub.s32 0, %v1527
      %v1529 = vrot.slane %v239, %v1528
      %v1530 = vmul.f32 %v1494, %v1529
      %v1531 = vmul.f32 %v1495, %v1529
      %v1532 = vmul.f32 %v1496, %v1529
      %v1533 = vmul.f32 %v1497, %v1529
      %v1534 = vmul.f32 %v1498, %v1529
      %v1535 = vmul.f32 %v1499, %v1529
      %v1536 = vmul.f32 %v1500, %v1529
      %v1537 = vmul.f32 %v1501, %v1529
      %v1538 = vmul.f32 %v1502, %v1529
      %v1539 = vmul.f32 %v1503, %v1529
      %v1540 = vmul.f32 %v1504, %v1529
      %v1541 = vmul.f32 %v1505, %v1529
      %v1542 = vmul.f32 %v1506, %v1529
      %v1543 = vmul.f32 %v1507, %v1529
      %v1544 = vmul.f32 %v1508, %v1529
      %v1545 = vmul.f32 %v1509, %v1529
      %v1546 = vmul.f32 %v1510, %v1529
      %v1547 = vmul.f32 %v1511, %v1529
      %v1548 = vmul.f32 %v1512, %v1529
      %v1549 = vmul.f32 %v1513, %v1529
      %v1550 = vmul.f32 %v1514, %v1529
      %v1551 = vmul.f32 %v1515, %v1529
      %v1552 = vmul.f32 %v1516, %v1529
      %v1553 = vmul.f32 %v1517, %v1529
      %v1554 = vmul.f32 %v1518, %v1529
      %v1555 = vmul.f32 %v1519, %v1529
      %v1556 = vmul.f32 %v1520, %v1529
      %v1557 = vmul.f32 %v1521, %v1529
      %v1558 = vmul.f32 %v1522, %v1529
      %v1559 = vmul.f32 %v1523, %v1529
      %v1560 = vmul.f32 %v1524, %v1529
      %v1561 = vmul.f32 %v1525, %v1529
      %v1562 = vlaneseq
      %v1563 = vshrl.u32 %v1562, 7
      %v1564 = vsub.s32 0, %v1563
      %v1565 = vrot.slane %v240, %v1564
      %v1566 = vadd.f32 %v1530, %v1565
      %v1567 = vadd.f32 %v1531, %v1565
      %v1568 = vadd.f32 %v1532, %v1565
      %v1569 = vadd.f32 %v1533, %v1565
      %v1570 = vadd.f32 %v1534, %v1565
      %v1571 = vadd.f32 %v1535, %v1565
      %v1572 = vadd.f32 %v1536, %v1565
      %v1573 = vadd.f32 %v1537, %v1565
      %v1574 = vadd.f32 %v1538, %v1565
      %v1575 = vadd.f32 %v1539, %v1565
      %v1576 = vadd.f32 %v1540, %v1565
      %v1577 = vadd.f32 %v1541, %v1565
      %v1578 = vadd.f32 %v1542, %v1565
      %v1579 = vadd.f32 %v1543, %v1565
      %v1580 = vadd.f32 %v1544, %v1565
      %v1581 = vadd.f32 %v1545, %v1565
      %v1582 = vadd.f32 %v1546, %v1565
      %v1583 = vadd.f32 %v1547, %v1565
      %v1584 = vadd.f32 %v1548, %v1565
      %v1585 = vadd.f32 %v1549, %v1565
      %v1586 = vadd.f32 %v1550, %v1565
      %v1587 = vadd.f32 %v1551, %v1565
      %v1588 = vadd.f32 %v1552, %v1565
      %v1589 = vadd.f32 %v1553, %v1565
      %v1590 = vadd.f32 %v1554, %v1565
      %v1591 = vadd.f32 %v1555, %v1565
      %v1592 = vadd.f32 %v1556, %v1565
      %v1593 = vadd.f32 %v1557, %v1565
      %v1594 = vadd.f32 %v1558, %v1565
      %v1595 = vadd.f32 %v1559, %v1565
      %v1596 = vadd.f32 %v1560, %v1565
      %v1597 = vadd.f32 %v1561, %v1565
      %v1598 = vpack.c.bf16 %v1567, %v1566
      %v1599 = vpack.c.bf16 %v1569, %v1568
      %v1600 = vpack.c.bf16 %v1571, %v1570
      %v1601 = vpack.c.bf16 %v1573, %v1572
      %v1602 = vpack.c.bf16 %v1575, %v1574
      %v1603 = vpack.c.bf16 %v1577, %v1576
      %v1604 = vpack.c.bf16 %v1579, %v1578
      %v1605 = vpack.c.bf16 %v1581, %v1580
      %v1606 = vpack.c.bf16 %v1583, %v1582
      %v1607 = vpack.c.bf16 %v1585, %v1584
      %v1608 = vpack.c.bf16 %v1587, %v1586
      %v1609 = vpack.c.bf16 %v1589, %v1588
      %v1610 = vpack.c.bf16 %v1591, %v1590
      %v1611 = vpack.c.bf16 %v1593, %v1592
      %v1612 = vpack.c.bf16 %v1595, %v1594
      %v1613 = vpack.c.bf16 %v1597, %v1596
      %s1614 = scalar_lea.vmem %s2, 128
      %v1615 = vld [vmem:[%s1614] sm:$0xf]
      %v1616 = vld [vmem:[%s1614 + $0x4] sm:$0xf]
      %v1617 = vld [vmem:[%s1614 + $0x8] sm:$0xf]
      %v1618 = vld [vmem:[%s1614 + $0xc] sm:$0xf]
      %v1619 = vld [vmem:[%s1614 + $0x10] sm:$0xf]
      %v1620 = vld [vmem:[%s1614 + $0x14] sm:$0xf]
      %v1621 = vld [vmem:[%s1614 + $0x18] sm:$0xf]
      %v1622 = vld [vmem:[%s1614 + $0x1c] sm:$0xf]
      %v1623 = vld [vmem:[%s1614 + $0x20] sm:$0xf]
      %v1624 = vld [vmem:[%s1614 + $0x24] sm:$0xf]
      %v1625 = vld [vmem:[%s1614 + $0x28] sm:$0xf]
      %v1626 = vld [vmem:[%s1614 + $0x2c] sm:$0xf]
      %v1627 = vld [vmem:[%s1614 + $0x30] sm:$0xf]
      %v1628 = vld [vmem:[%s1614 + $0x34] sm:$0xf]
      %v1629 = vld [vmem:[%s1614 + $0x38] sm:$0xf]
      %v1630 = vld [vmem:[%s1614 + $0x3c] sm:$0xf]
      %v1631 = vlaneseq
      %v1632 = vshrl.u32 %v1631, 7
      %v1633 = vsub.s32 0, %v1632
      %v1634 = vrot.slane %v241, %v1633
      %v1651 = vunpack.c.l.b16 %v1615
      %v1652 = vunpack.c.l.b16 %v1616
      %v1653 = vunpack.c.l.b16 %v1617
      %v1654 = vunpack.c.l.b16 %v1618
      %v1655 = vunpack.c.l.b16 %v1619
      %v1656 = vunpack.c.l.b16 %v1620
      %v1657 = vunpack.c.l.b16 %v1621
      %v1658 = vunpack.c.l.b16 %v1622
      %v1659 = vunpack.c.l.b16 %v1623
      %v1660 = vunpack.c.l.b16 %v1624
      %v1661 = vunpack.c.l.b16 %v1625
      %v1662 = vunpack.c.l.b16 %v1626
      %v1663 = vunpack.c.l.b16 %v1627
      %v1664 = vunpack.c.l.b16 %v1628
      %v1665 = vunpack.c.l.b16 %v1629
      %v1666 = vunpack.c.l.b16 %v1630
      %v1667 = vpack.c.b16 %v1652, %v1651
      %v1668 = vpack.c.b16 %v1654, %v1653
      %v1669 = vpack.c.b16 %v1656, %v1655
      %v1670 = vpack.c.b16 %v1658, %v1657
      %v1671 = vpack.c.b16 %v1660, %v1659
      %v1672 = vpack.c.b16 %v1662, %v1661
      %v1673 = vpack.c.b16 %v1664, %v1663
      %v1674 = vpack.c.b16 %v1666, %v1665
      %1683 = vmatprep.subr.bf16.mxu0 0
      %1684 = vmatpush1.bf16.msra.mxu0 %v1667
      %1685 = vmatprep.subr.bf16.mxu0 0
      %1686 = vmatpush1.bf16.msra.mxu0 %v1668
      %1687 = vmatprep.subr.bf16.mxu0 0
      %1688 = vmatpush1.bf16.msra.mxu0 %v1669
      %1689 = vmatprep.subr.bf16.mxu0 0
      %1690 = vmatpush1.bf16.msra.mxu0 %v1670
      %1691 = vmatprep.subr.bf16.mxu0 0
      %1692 = vmatpush1.bf16.msra.mxu0 %v1671
      %1693 = vmatprep.subr.bf16.mxu0 0
      %1694 = vmatpush1.bf16.msra.mxu0 %v1672
      %1695 = vmatprep.subr.bf16.mxu0 0
      %1696 = vmatpush1.bf16.msra.mxu0 %v1673
      %1697 = vmatprep.subr.bf16.mxu0 0
      %1698 = vmatpush1.bf16.msra.mxu0 %v1674
      %1699 = vmatprep.subr.bf16.mxu0 0
      %1700 = vmatpush1.bf16.msra.mxu0 0
      %1701 = vmatprep.subr.bf16.mxu0 0
      %1702 = vmatpush1.bf16.msra.mxu0 0
      %1703 = vmatprep.subr.bf16.mxu0 0
      %1704 = vmatpush1.bf16.msra.mxu0 0
      %1705 = vmatprep.subr.bf16.mxu0 0
      %1706 = vmatpush1.bf16.msra.mxu0 0
      %1707 = vmatprep.subr.bf16.mxu0 0
      %1708 = vmatpush1.bf16.msra.mxu0 0
      %1709 = vmatprep.subr.bf16.mxu0 0
      %1710 = vmatpush1.bf16.msra.mxu0 0
      %1711 = vmatprep.subr.bf16.mxu0 0
      %1712 = vmatpush1.bf16.msra.mxu0 0
      %1713 = vmatprep.subr.bf16.mxu0 0
      %1714 = vmatpush1.bf16.msra.mxu0 0
      %1715 = vmatprep.mubr.bf16.mxu0 0
      %1716 = vmatmul.mubr.bf16.gmra.mrb[0].mxu0 %v1598
      %v1717 = vpop.f32.mrb[0].mxu0
      %v1718 = vadd.f32 %v1634, %v1717
      %v1719 = vpop.f32.mrb[0].mxu0
      %v1720 = vpop.f32.mrb[0].mxu0
      %v1721 = vadd.f32 %v1634, %v1720
      %v1722 = vpop.f32.mrb[0].mxu0
      %1723 = vmatprep.mubr.bf16.mxu0 0
      %1724 = vmatmul.mubr.bf16.gmra.mrb[0].mxu0 %v1599
      %v1725 = vpop.f32.mrb[0].mxu0
      %v1726 = vadd.f32 %v1634, %v1725
      %v1727 = vpop.f32.mrb[0].mxu0
      %v1728 = vpop.f32.mrb[0].mxu0
      %v1729 = vadd.f32 %v1634, %v1728
      %v1730 = vpop.f32.mrb[0].mxu0
      %1731 = vmatprep.mubr.bf16.mxu0 0
      %1732 = vmatmul.mubr.bf16.gmra.mrb[0].mxu0 %v1600
      %v1733 = vpop.f32.mrb[0].mxu0
      %v1734 = vadd.f32 %v1634, %v1733
      %v1735 = vpop.f32.mrb[0].mxu0
      %v1736 = vpop.f32.mrb[0].mxu0
      %v1737 = vadd.f32 %v1634, %v1736
      %v1738 = vpop.f32.mrb[0].mxu0
      %1739 = vmatprep.mubr.bf16.mxu0 0
      %1740 = vmatmul.mubr.bf16.gmra.mrb[0].mxu0 %v1601
      %v1741 = vpop.f32.mrb[0].mxu0
      %v1742 = vadd.f32 %v1634, %v1741
      %v1743 = vpop.f32.mrb[0].mxu0
      %v1744 = vpop.f32.mrb[0].mxu0
      %v1745 = vadd.f32 %v1634, %v1744
      %v1746 = vpop.f32.mrb[0].mxu0
      %1747 = vmatprep.mubr.bf16.mxu0 0
      %1748 = vmatmul.mubr.bf16.gmra.mrb[0].mxu0 %v1602
      %v1749 = vpop.f32.mrb[0].mxu0
      %v1750 = vadd.f32 %v1634, %v1749
      %v1751 = vpop.f32.mrb[0].mxu0
      %v1752 = vpop.f32.mrb[0].mxu0
      %v1753 = vadd.f32 %v1634, %v1752
      %v1754 = vpop.f32.mrb[0].mxu0
      %1755 = vmatprep.mubr.bf16.mxu0 0
      %1756 = vmatmul.mubr.bf16.gmra.mrb[0].mxu0 %v1603
      %v1757 = vpop.f32.mrb[0].mxu0
      %v1758 = vadd.f32 %v1634, %v1757
      %v1759 = vpop.f32.mrb[0].mxu0
      %v1760 = vpop.f32.mrb[0].mxu0
      %v1761 = vadd.f32 %v1634, %v1760
      %v1762 = vpop.f32.mrb[0].mxu0
      %1763 = vmatprep.mubr.bf16.mxu0 0
      %1764 = vmatmul.mubr.bf16.gmra.mrb[0].mxu0 %v1604
      %v1765 = vpop.f32.mrb[0].mxu0
      %v1766 = vadd.f32 %v1634, %v1765
      %v1767 = vpop.f32.mrb[0].mxu0
      %v1768 = vpop.f32.mrb[0].mxu0
      %v1769 = vadd.f32 %v1634, %v1768
      %v1770 = vpop.f32.mrb[0].mxu0
      %1771 = vmatprep.mubr.bf16.mxu0 0
      %1772 = vmatmul.mubr.bf16.gmra.mrb[0].mxu0 %v1605
      %v1773 = vpop.f32.mrb[0].mxu0
      %v1774 = vadd.f32 %v1634, %v1773
      %v1775 = vpop.f32.mrb[0].mxu0
      %v1776 = vpop.f32.mrb[0].mxu0
      %v1777 = vadd.f32 %v1634, %v1776
      %v1778 = vpop.f32.mrb[0].mxu0
      %1779 = vmatprep.mubr.bf16.mxu0 0
      %1780 = vmatmul.mubr.bf16.gmra.mrb[0].mxu0 %v1606
      %v1781 = vpop.f32.mrb[0].mxu0
      %v1782 = vadd.f32 %v1634, %v1781
      %v1783 = vpop.f32.mrb[0].mxu0
      %v1784 = vpop.f32.mrb[0].mxu0
      %v1785 = vadd.f32 %v1634, %v1784
      %v1786 = vpop.f32.mrb[0].mxu0
      %1787 = vmatprep.mubr.bf16.mxu0 0
      %1788 = vmatmul.mubr.bf16.gmra.mrb[0].mxu0 %v1607
      %v1789 = vpop.f32.mrb[0].mxu0
      %v1790 = vadd.f32 %v1634, %v1789
      %v1791 = vpop.f32.mrb[0].mxu0
      %v1792 = vpop.f32.mrb[0].mxu0
      %v1793 = vadd.f32 %v1634, %v1792
      %v1794 = vpop.f32.mrb[0].mxu0
      %1795 = vmatprep.mubr.bf16.mxu0 0
      %1796 = vmatmul.mubr.bf16.gmra.mrb[0].mxu0 %v1608
      %v1797 = vpop.f32.mrb[0].mxu0
      %v1798 = vadd.f32 %v1634, %v1797
      %v1799 = vpop.f32.mrb[0].mxu0
      %v1800 = vpop.f32.mrb[0].mxu0
      %v1801 = vadd.f32 %v1634, %v1800
      %v1802 = vpop.f32.mrb[0].mxu0
      %1803 = vmatprep.mubr.bf16.mxu0 0
      %1804 = vmatmul.mubr.bf16.gmra.mrb[0].mxu0 %v1609
      %v1805 = vpop.f32.mrb[0].mxu0
      %v1806 = vadd.f32 %v1634, %v1805
      %v1807 = vpop.f32.mrb[0].mxu0
      %v1808 = vpop.f32.mrb[0].mxu0
      %v1809 = vadd.f32 %v1634, %v1808
      %v1810 = vpop.f32.mrb[0].mxu0
      %1811 = vmatprep.mubr.bf16.mxu0 0
      %1812 = vmatmul.mubr.bf16.gmra.mrb[0].mxu0 %v1610
      %v1813 = vpop.f32.mrb[0].mxu0
      %v1814 = vadd.f32 %v1634, %v1813
      %v1815 = vpop.f32.mrb[0].mxu0
      %v1816 = vpop.f32.mrb[0].mxu0
      %v1817 = vadd.f32 %v1634, %v1816
      %v1818 = vpop.f32.mrb[0].mxu0
      %1819 = vmatprep.mubr.bf16.mxu0 0
      %1820 = vmatmul.mubr.bf16.gmra.mrb[0].mxu0 %v1611
      %v1821 = vpop.f32.mrb[0].mxu0
      %v1822 = vadd.f32 %v1634, %v1821
      %v1823 = vpop.f32.mrb[0].mxu0
      %v1824 = vpop.f32.mrb[0].mxu0
      %v1825 = vadd.f32 %v1634, %v1824
      %v1826 = vpop.f32.mrb[0].mxu0
      %1827 = vmatprep.mubr.bf16.mxu0 0
      %1828 = vmatmul.mubr.bf16.gmra.mrb[0].mxu0 %v1612
      %v1829 = vpop.f32.mrb[0].mxu0
      %v1830 = vadd.f32 %v1634, %v1829
      %v1831 = vpop.f32.mrb[0].mxu0
      %v1832 = vpop.f32.mrb[0].mxu0
      %v1833 = vadd.f32 %v1634, %v1832
      %v1834 = vpop.f32.mrb[0].mxu0
      %1835 = vmatprep.mubr.bf16.mxu0 0
      %1836 = vmatmul.mubr.bf16.gmra.mrb[0].mxu0 %v1613
      %v1837 = vpop.f32.mrb[0].mxu0
      %v1838 = vadd.f32 %v1634, %v1837
      %v1839 = vpop.f32.mrb[0].mxu0
      %v1840 = vpop.f32.mrb[0].mxu0
      %v1841 = vadd.f32 %v1634, %v1840
      %v1842 = vpop.f32.mrb[0].mxu0
      %1843 = vdwg.mxu0
      %1844 = vst [vmem:[%s201] sm:$0xff] %v1566
      %1845 = vst [vmem:[%s201 + $0x10] sm:$0xff] %v1567
      %1846 = vst [vmem:[%s201 + $0x20] sm:$0xff] %v1568
      %1847 = vst [vmem:[%s201 + $0x30] sm:$0xff] %v1569
      %1848 = vst [vmem:[%s201 + $0x40] sm:$0xff] %v1570
      %1849 = vst [vmem:[%s201 + $0x50] sm:$0xff] %v1571
      %1850 = vst [vmem:[%s201 + $0x60] sm:$0xff] %v1572
      %1851 = vst [vmem:[%s201 + $0x70] sm:$0xff] %v1573
      %1852 = vst [vmem:[%s201 + $0x80] sm:$0xff] %v1574
      %1853 = vst [vmem:[%s201 + $0x90] sm:$0xff] %v1575
      %1854 = vst [vmem:[%s201 + $0xa0] sm:$0xff] %v1576
      %1855 = vst [vmem:[%s201 + $0xb0] sm:$0xff] %v1577
      %1856 = vst [vmem:[%s201 + $0xc0] sm:$0xff] %v1578
      %1857 = vst [vmem:[%s201 + $0xd0] sm:$0xff] %v1579
      %1858 = vst [vmem:[%s201 + $0xe0] sm:$0xff] %v1580
      %1859 = vst [vmem:[%s201 + $0xf0] sm:$0xff] %v1581
      %1860 = vst [vmem:[%s201 + $0x100] sm:$0xff] %v1582
      %1861 = vst [vmem:[%s201 + $0x110] sm:$0xff] %v1583
      %1862 = vst [vmem:[%s201 + $0x120] sm:$0xff] %v1584
      %1863 = vst [vmem:[%s201 + $0x130] sm:$0xff] %v1585
      %1864 = vst [vmem:[%s201 + $0x140] sm:$0xff] %v1586
      %1865 = vst [vmem:[%s201 + $0x150] sm:$0xff] %v1587
      %1866 = vst [vmem:[%s201 + $0x160] sm:$0xff] %v1588
      %1867 = vst [vmem:[%s201 + $0x170] sm:$0xff] %v1589
      %1868 = vst [vmem:[%s201 + $0x180] sm:$0xff] %v1590
      %1869 = vst [vmem:[%s201 + $0x190] sm:$0xff] %v1591
      %1870 = vst [vmem:[%s201 + $0x1a0] sm:$0xff] %v1592
      %1871 = vst [vmem:[%s201 + $0x1b0] sm:$0xff] %v1593
      %1872 = vst [vmem:[%s201 + $0x1c0] sm:$0xff] %v1594
      %1873 = vst [vmem:[%s201 + $0x1d0] sm:$0xff] %v1595
      %1874 = vst [vmem:[%s201 + $0x1e0] sm:$0xff] %v1596
      %1875 = vst [vmem:[%s201 + $0x1f0] sm:$0xff] %v1597
      %1876 = vst [vmem:[%s201 + $0x8] sm:$0xff] %v1718
      %1877 = vst [vmem:[%s201 + $0x18] sm:$0xff] %v1721
      %1878 = vst [vmem:[%s201 + $0x28] sm:$0xff] %v1726
      %1879 = vst [vmem:[%s201 + $0x38] sm:$0xff] %v1729
      %1880 = vst [vmem:[%s201 + $0x48] sm:$0xff] %v1734
      %1881 = vst [vmem:[%s201 + $0x58] sm:$0xff] %v1737
      %1882 = vst [vmem:[%s201 + $0x68] sm:$0xff] %v1742
      %1883 = vst [vmem:[%s201 + $0x78] sm:$0xff] %v1745
      %1884 = vst [vmem:[%s201 + $0x88] sm:$0xff] %v1750
      %1885 = vst [vmem:[%s201 + $0x98] sm:$0xff] %v1753
      %1886 = vst [vmem:[%s201 + $0xa8] sm:$0xff] %v1758
      %1887 = vst [vmem:[%s201 + $0xb8] sm:$0xff] %v1761
      %1888 = vst [vmem:[%s201 + $0xc8] sm:$0xff] %v1766
      %1889 = vst [vmem:[%s201 + $0xd8] sm:$0xff] %v1769
      %1890 = vst [vmem:[%s201 + $0xe8] sm:$0xff] %v1774
      %1891 = vst [vmem:[%s201 + $0xf8] sm:$0xff] %v1777
      %1892 = vst [vmem:[%s201 + $0x108] sm:$0xff] %v1782
      %1893 = vst [vmem:[%s201 + $0x118] sm:$0xff] %v1785
      %1894 = vst [vmem:[%s201 + $0x128] sm:$0xff] %v1790
      %1895 = vst [vmem:[%s201 + $0x138] sm:$0xff] %v1793
      %1896 = vst [vmem:[%s201 + $0x148] sm:$0xff] %v1798
      %1897 = vst [vmem:[%s201 + $0x158] sm:$0xff] %v1801
      %1898 = vst [vmem:[%s201 + $0x168] sm:$0xff] %v1806
      %1899 = vst [vmem:[%s201 + $0x178] sm:$0xff] %v1809
      %1900 = vst [vmem:[%s201 + $0x188] sm:$0xff] %v1814
      %1901 = vst [vmem:[%s201 + $0x198] sm:$0xff] %v1817
      %1902 = vst [vmem:[%s201 + $0x1a8] sm:$0xff] %v1822
      %1903 = vst [vmem:[%s201 + $0x1b8] sm:$0xff] %v1825
      %1904 = vst [vmem:[%s201 + $0x1c8] sm:$0xff] %v1830
      %1905 = vst [vmem:[%s201 + $0x1d8] sm:$0xff] %v1833
      %1906 = vst [vmem:[%s201 + $0x1e8] sm:$0xff] %v1838
      %1907 = vst [vmem:[%s201 + $0x1f8] sm:$0xff] %v1841
      %s1908 = smul.u32 32, %s15
      %p1909 = scmp.lt.s32.totalorder %s1908, 63
      %s1910 = scalar_select %p1909, %s1908, 63
      %s1911 = smul.addr %s1910, 2
      %s1912 = smul.addr %s1911, 8
      %s1913 = scalar_lea.vmem %s4, %s1912
      // Predicated region
      $region37: #{adapter_classifier.1} parent=35 // pred_check
        %p1914 = pneg %p122
      $region38: #{adapter_classifier.1} parent=35 // pred_check_branch
        %1916 = sbr.rel (%p1914) target = $region40
      $region39: #{adapter_classifier.1} parent=35 // pred_region
        %s1917 = smul.u32 32, %s15
      $region40: #{adapter_classifier.1} parent=35 // pred_fallthru
        _
    $region36: #{adapter_classifier.1} parent=5 // pred_fallthru
      _
    %p1918 = scmp.le.s32.totalorder 2, %s10
    // Predicated region
    $region41: #{adapter_classifier.1} parent=5 // pred_check
      %p1919 = pneg %p1918
    $region42: #{adapter_classifier.1} parent=5 // pred_check_branch
      %1921 = sbr.rel (%p1919) target = $region44
    $region43: #{adapter_classifier.1} parent=5 // pred_region
      %s1922 = ssub.s32 %s10, 2
      // Predicated region
      $region45: #{adapter_classifier.1} parent=43 // pred_check
        %p1923 = pneg %p128
      $region46: #{adapter_classifier.1} parent=43 // pred_check_branch
        %1925 = sbr.rel (%p1923) target = $region48
      $region47: #{adapter_classifier.1} parent=43 // pred_region
        %s1926 = smul.u32 32, %s16
        %p1927 = scmp.lt.s32.totalorder %s1926, 63
        %s1928 = scalar_select %p1927, %s1926, 63
        %s1929 = smul.addr %s1928, 2
        %s1930 = smul.addr %s1929, 8
        %s1931 = scalar_lea.vmem %s4, %s1930
      $region48: #{adapter_classifier.1} parent=43 // pred_fallthru
        _
    $region44: #{adapter_classifier.1} parent=5 // pred_fallthru
      _
  $region6: #{adapter_classifier.1} parent=0 // loop_footer
    %s14 = sadd.s32 1, %s10
  $region7: #{adapter_classifier.1} parent=0 // loop_footer_branch
    %9 = sbr.rel target = $region3
  $region8: #{adapter_classifier.1} parent=0 // loop_exit
    _

</llo_original>
